<compile_context>
chip_gen: v5e
topology: v5e:2x2
jax: 0.10.0
libtpu: 0.0.40
codegen_flags: <defaults>
</compile_context>

<pallas_src>
import math

import numpy as np
import jax
import jax.numpy as jnp
from jax.experimental import pallas as pl
from jax.experimental.pallas import tpu as pltpu

LANE = 128
SUB = 8


def _round_up(x, m):
    return ((x + m - 1) // m) * m


def pdu_write_kernel(rev_ref, fwd_ref, upds_ref, dec_ref, pha_ref,
                     str_ref, sti_ref, or_ref, oi_ref, df_ref):
    """One lane tile of the PDU memory write.

    rev_ref          : (Tp, T)  resident mask, rev[t, s] = [s >= t]
    fwd_ref          : (Tp, Tp) resident mask, fwd[t, s] = [s <= t]
    upds_ref         : (Tp, L)  pre-shifted real updates (row 0 and rows > T are 0)
    dec_ref, pha_ref : (T,  L)  decay / phase logits
    str_ref, sti_ref : (1,  L)  real / imag parts of the initial state
    or_ref, oi_ref   : (Tp, L)  real / imag trajectory (rows 1..T are valid)
    df_ref           : (Tp, L)  exp(-reverse_cumsum(decay)) (rows 0..T valid)
    """
    f32 = jnp.float32
    rev = rev_ref[...]
    fwd = fwd_ref[...]

    # --- reverse cumsum of the logits (masked MXU matmuls) -------------------
    # TODO(synk): for MXU-bound large T, split into bf16 hi/lo matmuls (~1.5x
    #             MXU) and/or block the time axis (blocked scan) instead of the
    #             O(T^2) dense masks.
    cum_dec = jnp.dot(rev, dec_ref[...], preferred_element_type=f32)
    cum_pha = jnp.dot(rev, pha_ref[...], preferred_element_type=f32)

    # adjustment_factor = exp(-cum_dec - 1j*cum_pha); its amplitude is output 3
    # TODO(synk): exp(-cum_dec) can under/overflow in f32 for very long
    #             sequences / large decay logits (the f64 reference would not),
    #             and cum_pha is not range-reduced before cos/sin.
    damp = jnp.exp(-cum_dec)
    cosp = jnp.cos(cum_pha)
    sinp = jnp.sin(cum_pha)
    df_ref[...] = damp

    adj_re = damp * cosp          # stays in vregs -- no stash through outputs
    adj_im = -damp * sinp

    # adjusted updates: the update slab is already shifted by one row in the
    # wrapper (row s holds update[s-1]); update is real -> 2 muls per element.
    upds = upds_ref[...]
    au_r = upds * adj_re
    au_i = upds * adj_im

    # --- inclusive forward cumsum (masked MXU matmuls) -----------------------
    car = jnp.dot(fwd, au_r, preferred_element_type=f32)
    cai = jnp.dot(fwd, au_i, preferred_element_type=f32)

    # initial-state contribution: state * adj[0], broadcast over sublanes.
    a0r = adj_re[0:1, :]
    a0i = adj_im[0:1, :]
    st_r = str_ref[...]
    st_i = sti_ref[...]
    car = car + (st_r * a0r - st_i * a0i)
    cai = cai + (st_r * a0i + st_i * a0r)

    # undo the adjustment: 1/adj = exp(+cum_dec) * (cos + 1j*sin).
    # EUP approx reciprocal + one Newton step on the VPU (keeps ~1e-7 rel err).
    inv = pl.reciprocal(damp, approx=True)
    inv = inv * (2.0 - damp * inv)
    inv_re = inv * cosp
    inv_im = inv * sinp

    or_ref[...] = car * inv_re - cai * inv_im
    oi_ref[...] = car * inv_im + cai * inv_re


def _tpu_budget():
    """Generation-aware (VMEM budget, vmem_limit_bytes, TensorCores/chip)."""
    vmem_cap = 64 * 1024 * 1024
    num_cores = 1
    try:
        info = pltpu.get_tpu_info()
    except Exception:
        info = None
    if info is not None:
        cap = getattr(info, "vmem_capacity_bytes", None)
        if isinstance(cap, (int, np.integer)) and cap > 0:
            vmem_cap = int(cap)
        for attr in ("num_cores", "num_tensorcores", "tensorcores_per_chip",
                     "cores_per_chip"):
            v = getattr(info, attr, None)
            if isinstance(v, (int, np.integer)) and v > 0:
                num_cores = int(v)
                break
        else:
            ver = getattr(info, "chip_version", None)
            if ver is not None and "7" in str(ver):
                num_cores = 2          # v7x: 2 TensorCores per chip
    budget = min(vmem_cap // 2, 48 * 1024 * 1024)     # 48 MiB on v5e/v6e
    limit = min(vmem_cap * 3 // 4, 2 * budget)
    if num_cores > 1:                                  # v7x: 64 MiB per core
        budget = min(budget, 28 * 1024 * 1024)
        limit = min(limit, 48 * 1024 * 1024)
    limit = max(limit, 32 * 1024 * 1024)
    return budget, int(limit), num_cores


def pdu_memory_writer(update, decay_logits, phase_logits, state):
    """Pallas implementation of PDUMemoryWriter.forward.

    update / decay_logits / phase_logits : (..., chunk, T, D)  real float
    state                                : (..., chunk, 1, D)  complex64

    Returns:
      output       : (..., chunk, T,   D) complex64
      decay_factor : (..., chunk, T+1, D) float32
    """
    # TODO(synk): reference upcasts to float64/complex128; TPU has no f64, so
    #             everything here is float32 / split complex64.
    # TODO(synk): complex-valued `update` (allowed by the reference cast) would
    #             need an extra imaginary-update plane; real updates only here.
    if jnp.issubdtype(update.dtype, jnp.complexfloating):
        raise NotImplementedError("complex update tensors are not supported")

    f32 = jnp.float32
    lead = update.shape[:-2]
    T, D = update.shape[-2], update.shape[-1]
    n = int(np.prod(lead)) if lead else 1
    Tp = _round_up(T + 1, SUB)

    budget_bytes, vmem_limit, num_cores = _tpu_budget()
    # Per-lane f32 working-set model: double-buffered I/O blocks
    # (upds Tp + dec/pha 2T + state 2 + 3 outputs of Tp rows) + ~10 live temps.
    mask_bytes = 2 * 4 * (Tp * T + Tp * Tp)
    avail = max(budget_bytes - mask_bytes, 4 * 1024 * 1024)
    bytes_per_lane = 4 * (18 * Tp + 4 * T + 4)
    max_tile = max(LANE, (avail // bytes_per_lane) // LANE * LANE)

    cdtype = (state.dtype if jnp.issubdtype(state.dtype, jnp.complexfloating)
              else jnp.complex64)

    # Triangular masks, built once and kept resident (constant index_map).
    t_i = jnp.arange(Tp, dtype=jnp.int32)[:, None]
    rev = (jnp.arange(T, dtype=jnp.int32)[None, :] >= t_i).astype(f32)
    fwd = (jnp.arange(Tp, dtype=jnp.int32)[None, :] <= t_i).astype(f32)

    native = (D % LANE == 0)
    if native:
        # --- native-layout path: grid over (batch, D tiles); no transposes ---
        # TODO(synk): for D == 128 with a huge batch, a fused-lane slab would
        #             give wider stores; kept native here for simplicity.
        d_tile = max(LANE, min(D, max_tile) // LANE * LANE)
        while D % d_tile != 0:
            d_tile -= LANE
        while (num_cores > 1 and n * (D // d_tile) < num_cores
               and d_tile % (2 * LANE) == 0):
            d_tile //= 2

        upd_n = update.astype(f32).reshape(n, T, D)
        # Pre-shift by one time row (absorbs the prepended state row) and pad
        # to Tp rows so the in-kernel elementwise product is fully aligned.
        upds_n = jnp.pad(upd_n, ((0, 0), (1, Tp - 1 - T), (0, 0)))
        dec_n = decay_logits.astype(f32).reshape(n, T, D)
        pha_n = phase_logits.astype(f32).reshape(n, T, D)
        str_n = jnp.real(state).astype(f32).reshape(n, 1, D)
        sti_n = jnp.imag(state).astype(f32).reshape(n, 1, D)

        grid = (n, D // d_tile)
        dims = ("parallel", "parallel")
        in_specs = [
            pl.BlockSpec((Tp, T), lambda b, j: (0, 0)),
            pl.BlockSpec((Tp, Tp), lambda b, j: (0, 0)),
            pl.BlockSpec((None, Tp, d_tile), lambda b, j: (b, 0, j)),
            pl.BlockSpec((None, T, d_tile), lambda b, j: (b, 0, j)),
            pl.BlockSpec((None, T, d_tile), lambda b, j: (b, 0, j)),
            pl.BlockSpec((None, 1, d_tile), lambda b, j: (b, 0, j)),
            pl.BlockSpec((None, 1, d_tile), lambda b, j: (b, 0, j)),
        ]
        out_specs = [pl.BlockSpec((None, Tp, d_tile),
                                  lambda b, j: (b, 0, j))] * 3
        out_shape = [jax.ShapeDtypeStruct((n, Tp, D), f32)] * 3
        args = (rev, fwd, upds_n, dec_n, pha_n, str_n, sti_n)
        width = n * D
        nd = nd_pad = None  # unused
    else:
        # --- slab fallback (small / odd D): (time, batch*D) lane-padded slabs.
        nd = n * D
        nd128 = _round_up(nd, LANE)
        tile = min(nd128, max_tile)
        while (num_cores > 1 and pl.cdiv(nd128, tile) < num_cores
               and tile % (2 * LANE) == 0):
            tile //= 2
        nd_pad = _round_up(nd, tile)

        def to_slab(x, rows, row0=0):
            t = x.shape[-2]
            x = x.astype(f32).reshape(n, t, D)
            x = jnp.transpose(x, (1, 0, 2)).reshape(t, nd)
            if rows != t or row0 != 0 or nd_pad != nd:
                x = jnp.pad(x, ((row0, rows - row0 - t), (0, nd_pad - nd)))
            return x

        upds_s = to_slab(update, Tp, row0=1)        # pre-shifted update rows
        dec_s = to_slab(decay_logits, T)
        pha_s = to_slab(phase_logits, T)
        str_s = to_slab(jnp.real(state), 1)
        sti_s = to_slab(jnp.imag(state), 1)

        grid = (nd_pad // tile,)
        dims = ("parallel",)
        in_specs = [
            pl.BlockSpec((Tp, T), lambda j: (0, 0)),
            pl.BlockSpec((Tp, Tp), lambda j: (0, 0)),
            pl.BlockSpec((Tp, tile), lambda j: (0, j)),
            pl.BlockSpec((T, tile), lambda j: (0, j)),
            pl.BlockSpec((T, tile), lambda j: (0, j)),
            pl.BlockSpec((1, tile), lambda j: (0, j)),
            pl.BlockSpec((1, tile), lambda j: (0, j)),
        ]
        out_specs = [pl.BlockSpec((Tp, tile), lambda j: (0, j))] * 3
        out_shape = [jax.ShapeDtypeStruct((Tp, nd_pad), f32)] * 3
        args = (rev, fwd, upds_s, dec_s, pha_s, str_s, sti_s)
        width = nd_pad

    cost = pl.CostEstimate(
        flops=int(4 * width * Tp * (T + Tp) + 20 * width * Tp),
        transcendentals=int(4 * width * Tp),
        bytes_accessed=int(4 * width * (2 * T + 4 * Tp + 2)),
    )

    out_r, out_i, dfac = pl.pallas_call(
        pdu_write_kernel,
        out_shape=out_shape,
        grid_spec=pltpu.PrefetchScalarGridSpec(
            num_scalar_prefetch=0,
            grid=grid,
            in_specs=in_specs,
            out_specs=out_specs,
        ),
        compiler_params=pltpu.CompilerParams(
            dimension_semantics=dims,
            vmem_limit_bytes=vmem_limit),
        cost_estimate=cost,
    )(*args)

    if native:
        out = (out_r[:, 1:T + 1, :] + 1j * out_i[:, 1:T + 1, :]).astype(cdtype)
        out = out.reshape(lead + (T, D))
        decay_factor = dfac[:, 0:T + 1, :].reshape(lead + (T + 1, D))
    else:
        def from_slab(x, t0, t1):
            x = x[t0:t1, :nd].reshape(t1 - t0, n, D)
            return jnp.transpose(x, (1, 0, 2)).reshape(lead + (t1 - t0, D))

        out = (from_slab(out_r, 1, T + 1)
               + 1j * from_slab(out_i, 1, T + 1)).astype(cdtype)
        decay_factor = from_slab(dfac, 0, T + 1)
    return out, decay_factor


def pdu_memory_writer_reference(update, decay_logits, phase_logits, state):
    """Pure-JAX reference mirroring the PyTorch forward (float32/complex64)."""
    upd = jnp.concatenate([state.astype(jnp.complex64),
                           update.astype(jnp.complex64)], axis=-2)
    z = jnp.zeros(state.shape, dtype=jnp.float32)
    dec = jnp.concatenate([decay_logits.astype(jnp.float32), z], axis=-2)
    pha = jnp.concatenate([phase_logits.astype(jnp.float32), z], axis=-2)

    def bcs(x):
        return jnp.flip(jnp.cumsum(jnp.flip(x, axis=-2), axis=-2), axis=-2)

    cd = bcs(dec)
    cp = bcs(pha)
    adj = jnp.exp(-cd - 1j * cp)
    out = jnp.cumsum(upd * adj, axis=-2) / adj
    return out[..., 1:, :].astype(state.dtype), jnp.exp(-cd)


if __name__ == "__main__":
    def run_case(batch, chunk, T, D):
        key = jax.random.PRNGKey(0)
        k1, k2, k3, k4, k5 = jax.random.split(key, 5)
        update = jax.random.normal(k1, (batch, chunk, T, D), dtype=jnp.float32)
        decay_logits = jax.random.uniform(
            k2, (batch, chunk, T, D), dtype=jnp.float32)
        phase_logits = jax.random.uniform(
            k3, (batch, chunk, T, D), dtype=jnp.float32,
            minval=-math.pi, maxval=math.pi)
        state = (jax.random.normal(k4, (batch, chunk, 1, D), dtype=jnp.float32)
                 + 1j * jax.random.normal(k5, (batch, chunk, 1, D),
                                          dtype=jnp.float32)
                 ).astype(jnp.complex64)

        out, dfac = pdu_memory_writer(update, decay_logits, phase_logits, state)
        jax.block_until_ready(out)
        jax.block_until_ready(dfac)

        ref_out, ref_dfac = pdu_memory_writer_reference(
            update, decay_logits, phase_logits, state)
        np.testing.assert_allclose(np.asarray(out), np.asarray(ref_out),
                                   rtol=2e-4, atol=2e-4)
        np.testing.assert_allclose(np.asarray(dfac), np.asarray(ref_dfac),
                                   rtol=2e-4, atol=2e-4)
        assert out.shape == (batch, chunk, T, D) and out.dtype == jnp.complex64
        assert dfac.shape == (batch, chunk, T + 1, D)

    # Small shapes consistent with (..., chunk, timestep, d_memory).
    run_case(batch=2, chunk=4, T=8, D=32)    # slab fallback path (D % 128 != 0)
    run_case(batch=2, chunk=2, T=5, D=128)   # native-layout path (D % 128 == 0)
    print("KERNEL_OK")
</pallas_src>

<mosaic_0001>
module attributes {stable_mosaic.version = 11 : i64} {
  func.func @pdu_write_kernel(%arg0: i32, %arg1: memref<16x8xf32, #tpu.memory_space<vmem>>, %arg2: memref<16x16xf32, #tpu.memory_space<vmem>>, %arg3: memref<16x256xf32, #tpu.memory_space<vmem>>, %arg4: memref<8x256xf32, #tpu.memory_space<vmem>>, %arg5: memref<8x256xf32, #tpu.memory_space<vmem>>, %arg6: memref<1x256xf32, #tpu.memory_space<vmem>>, %arg7: memref<1x256xf32, #tpu.memory_space<vmem>>, %arg8: memref<16x256xf32, #tpu.memory_space<vmem>>, %arg9: memref<16x256xf32, #tpu.memory_space<vmem>>, %arg10: memref<16x256xf32, #tpu.memory_space<vmem>>) attributes {dimension_semantics = [#tpu.dimension_semantics<parallel>], iteration_bounds = array<i64: 1>, scalar_prefetch = 0 : i64, scratch_operands = 0 : i64, tpu.core_type = #tpu.core_type<tc>, window_params = [{pipeline_mode = #tpu.pipeline_mode<synchronous>, transform_indices = @transform_0, window_bounds = array<i64: 16, 8>}, {pipeline_mode = #tpu.pipeline_mode<synchronous>, transform_indices = @transform_1, window_bounds = array<i64: 16, 16>}, {transform_indices = @transform_2, window_bounds = array<i64: 16, 256>}, {transform_indices = @transform_3, window_bounds = array<i64: 8, 256>}, {transform_indices = @transform_4, window_bounds = array<i64: 8, 256>}, {transform_indices = @transform_5, window_bounds = array<i64: 1, 256>}, {transform_indices = @transform_6, window_bounds = array<i64: 1, 256>}, {transform_indices = @transform_7, window_bounds = array<i64: 16, 256>}, {transform_indices = @transform_8, window_bounds = array<i64: 16, 256>}, {transform_indices = @transform_9, window_bounds = array<i64: 16, 256>}]} {
    %c0 = arith.constant 0 : index
    %c0_0 = arith.constant 0 : index
    %0 = vector.load %arg1[%c0, %c0_0] : memref<16x8xf32, #tpu.memory_space<vmem>>, vector<16x8xf32>
    %c0_1 = arith.constant 0 : index
    %c0_2 = arith.constant 0 : index
    %1 = vector.load %arg2[%c0_1, %c0_2] : memref<16x16xf32, #tpu.memory_space<vmem>>, vector<16x16xf32>
    %c0_3 = arith.constant 0 : index
    %c0_4 = arith.constant 0 : index
    %2 = vector.load %arg4[%c0_3, %c0_4] : memref<8x256xf32, #tpu.memory_space<vmem>>, vector<8x256xf32>
    %cst = arith.constant dense<0.000000e+00> : vector<16x256xf32>
    %3 = tpu.matmul %0, %2, %cst {dimension_numbers = #tpu.dot_dimension_numbers<[1], [0], [0], [1], [0, 0, 1, 1], [], []>} : vector<16x8xf32>, vector<8x256xf32>, vector<16x256xf32> -> vector<16x256xf32>
    %c0_5 = arith.constant 0 : index
    %c0_6 = arith.constant 0 : index
    %4 = vector.load %arg5[%c0_5, %c0_6] : memref<8x256xf32, #tpu.memory_space<vmem>>, vector<8x256xf32>
    %cst_7 = arith.constant dense<0.000000e+00> : vector<16x256xf32>
    %5 = tpu.matmul %0, %4, %cst_7 {dimension_numbers = #tpu.dot_dimension_numbers<[1], [0], [0], [1], [0, 0, 1, 1], [], []>} : vector<16x8xf32>, vector<8x256xf32>, vector<16x256xf32> -> vector<16x256xf32>
    %cst_8 = arith.constant 0.000000e+00 : f32
    %6 = vector.broadcast %cst_8 : f32 to vector<16x256xf32>
    %7 = arith.subf %6, %3 : vector<16x256xf32>
    %8 = math.exp %7 : vector<16x256xf32>
    %9 = math.cos %5 : vector<16x256xf32>
    %10 = math.sin %5 : vector<16x256xf32>
    %c0_9 = arith.constant 0 : index
    %c0_10 = arith.constant 0 : index
    %11 = vector.load %arg10[%c0_9, %c0_10] : memref<16x256xf32, #tpu.memory_space<vmem>>, vector<16x256xf32>
    tpu.vector_store %arg10[%c0_9, %c0_10], %8 {strides = array<i32>} : memref<16x256xf32, #tpu.memory_space<vmem>>, vector<16x256xf32>,
    %12 = arith.mulf %8, %9 : vector<16x256xf32>
    %cst_11 = arith.constant 0.000000e+00 : f32
    %13 = vector.broadcast %cst_11 : f32 to vector<16x256xf32>
    %14 = arith.subf %13, %8 : vector<16x256xf32>
    %15 = arith.mulf %14, %10 : vector<16x256xf32>
    %c0_12 = arith.constant 0 : index
    %c0_13 = arith.constant 0 : index
    %16 = vector.load %arg3[%c0_12, %c0_13] : memref<16x256xf32, #tpu.memory_space<vmem>>, vector<16x256xf32>
    %17 = arith.mulf %16, %12 : vector<16x256xf32>
    %18 = arith.mulf %16, %15 : vector<16x256xf32>
    %cst_14 = arith.constant dense<0.000000e+00> : vector<16x256xf32>
    %19 = tpu.matmul %1, %17, %cst_14 {dimension_numbers = #tpu.dot_dimension_numbers<[1], [0], [0], [1], [0, 0, 1, 1], [], []>} : vector<16x16xf32>, vector<16x256xf32>, vector<16x256xf32> -> vector<16x256xf32>
    %cst_15 = arith.constant dense<0.000000e+00> : vector<16x256xf32>
    %20 = tpu.matmul %1, %18, %cst_15 {dimension_numbers = #tpu.dot_dimension_numbers<[1], [0], [0], [1], [0, 0, 1, 1], [], []>} : vector<16x16xf32>, vector<16x256xf32>, vector<16x256xf32> -> vector<16x256xf32>
    %21 = vector.extract_strided_slice %12 {offsets = [0, 0], sizes = [1, 256], strides = [1, 1]} : vector<16x256xf32> to vector<1x256xf32>
    %22 = vector.extract_strided_slice %15 {offsets = [0, 0], sizes = [1, 256], strides = [1, 1]} : vector<16x256xf32> to vector<1x256xf32>
    %c0_16 = arith.constant 0 : index
    %c0_17 = arith.constant 0 : index
    %23 = vector.load %arg6[%c0_16, %c0_17] : memref<1x256xf32, #tpu.memory_space<vmem>>, vector<1x256xf32>
    %c0_18 = arith.constant 0 : index
    %c0_19 = arith.constant 0 : index
    %24 = vector.load %arg7[%c0_18, %c0_19] : memref<1x256xf32, #tpu.memory_space<vmem>>, vector<1x256xf32>
    %25 = arith.mulf %23, %21 : vector<1x256xf32>
    %26 = arith.mulf %24, %22 : vector<1x256xf32>
    %27 = arith.subf %25, %26 : vector<1x256xf32>
    %28 = vector.broadcast %27 : vector<1x256xf32> to vector<16x256xf32>
    %29 = arith.addf %19, %28 : vector<16x256xf32>
    %30 = arith.mulf %23, %22 : vector<1x256xf32>
    %31 = arith.mulf %24, %21 : vector<1x256xf32>
    %32 = arith.addf %30, %31 : vector<1x256xf32>
    %33 = vector.broadcast %32 : vector<1x256xf32> to vector<16x256xf32>
    %34 = arith.addf %20, %33 : vector<16x256xf32>
    %35 = tpu.reciprocal %8 {approx = true} : vector<16x256xf32> -> vector<16x256xf32>
    %36 = arith.mulf %8, %35 : vector<16x256xf32>
    %cst_20 = arith.constant 2.000000e+00 : f32
    %37 = vector.broadcast %cst_20 : f32 to vector<16x256xf32>
    %38 = arith.subf %37, %36 : vector<16x256xf32>
    %39 = arith.mulf %35, %38 : vector<16x256xf32>
    %40 = arith.mulf %39, %9 : vector<16x256xf32>
    %41 = arith.mulf %39, %10 : vector<16x256xf32>
    %42 = arith.mulf %29, %40 : vector<16x256xf32>
    %43 = arith.mulf %34, %41 : vector<16x256xf32>
    %44 = arith.subf %42, %43 : vector<16x256xf32>
    %c0_21 = arith.constant 0 : index
    %c0_22 = arith.constant 0 : index
    %45 = vector.load %arg8[%c0_21, %c0_22] : memref<16x256xf32, #tpu.memory_space<vmem>>, vector<16x256xf32>
    tpu.vector_store %arg8[%c0_21, %c0_22], %44 {strides = array<i32>} : memref<16x256xf32, #tpu.memory_space<vmem>>, vector<16x256xf32>,
    %46 = arith.mulf %29, %41 : vector<16x256xf32>
    %47 = arith.mulf %34, %40 : vector<16x256xf32>
    %48 = arith.addf %46, %47 : vector<16x256xf32>
    %c0_23 = arith.constant 0 : index
    %c0_24 = arith.constant 0 : index
    %49 = vector.load %arg9[%c0_23, %c0_24] : memref<16x256xf32, #tpu.memory_space<vmem>>, vector<16x256xf32>
    tpu.vector_store %arg9[%c0_23, %c0_24], %48 {strides = array<i32>} : memref<16x256xf32, #tpu.memory_space<vmem>>, vector<16x256xf32>,
    return
  }
  func.func @transform_0(%arg0: i32) -> (i32, i32) {
    %c0_i32 = arith.constant 0 : i32
    %c0_i32_0 = arith.constant 0 : i32
    %c0_i32_1 = arith.constant 0 : i32
    return %c0_i32, %c0_i32_0 : i32, i32
  }
  func.func @transform_1(%arg0: i32) -> (i32, i32) {
    %c0_i32 = arith.constant 0 : i32
    %c0_i32_0 = arith.constant 0 : i32
    %c0_i32_1 = arith.constant 0 : i32
    return %c0_i32, %c0_i32_0 : i32, i32
  }
  func.func @transform_2(%arg0: i32) -> (i32, i32) {
    %c0_i32 = arith.constant 0 : i32
    %c0_i32_0 = arith.constant 0 : i32
    return %c0_i32, %arg0 : i32, i32
  }
  func.func @transform_3(%arg0: i32) -> (i32, i32) {
    %c0_i32 = arith.constant 0 : i32
    %c0_i32_0 = arith.constant 0 : i32
    return %c0_i32, %arg0 : i32, i32
  }
  func.func @transform_4(%arg0: i32) -> (i32, i32) {
    %c0_i32 = arith.constant 0 : i32
    %c0_i32_0 = arith.constant 0 : i32
    return %c0_i32, %arg0 : i32, i32
  }
  func.func @transform_5(%arg0: i32) -> (i32, i32) {
    %c0_i32 = arith.constant 0 : i32
    %c0_i32_0 = arith.constant 0 : i32
    return %c0_i32, %arg0 : i32, i32
  }
  func.func @transform_6(%arg0: i32) -> (i32, i32) {
    %c0_i32 = arith.constant 0 : i32
    %c0_i32_0 = arith.constant 0 : i32
    return %c0_i32, %arg0 : i32, i32
  }
  func.func @transform_7(%arg0: i32) -> (i32, i32) {
    %c0_i32 = arith.constant 0 : i32
    %c0_i32_0 = arith.constant 0 : i32
    return %c0_i32, %arg0 : i32, i32
  }
  func.func @transform_8(%arg0: i32) -> (i32, i32) {
    %c0_i32 = arith.constant 0 : i32
    %c0_i32_0 = arith.constant 0 : i32
    return %c0_i32, %arg0 : i32, i32
  }
  func.func @transform_9(%arg0: i32) -> (i32, i32) {
    %c0_i32 = arith.constant 0 : i32
    %c0_i32_0 = arith.constant 0 : i32
    return %c0_i32, %arg0 : i32, i32
  }
}

</mosaic_0001>

<llo_original>
// kernel: tpu_custom_call.1
$region0: #{tpu_custom_call.1}
  #allocation0 [shape = 'u32[]', space=smem, size = 0x4, offset = 0x4, fixed_abs, tag = 'smem constant byte address 0x4 - core index']
  #allocation1 [shape = 'u32[72,128]{1,0:T(1,128)}', space=vmem, size = 0x9000, scoped, tag = 'internal scratch']
  %s0 = inlined_call_operand.vmem [shape: f32[16,8], index: 0, kind: input, shape index: {}]
  %s1 = inlined_call_operand.vmem [shape: f32[16,16], index: 1, kind: input, shape index: {}]
  %s2 = inlined_call_operand.hbm [shape: f32[16,256], index: 2, kind: input, shape index: {}]
  %s3 = inlined_call_operand.hbm [shape: f32[8,256], index: 3, kind: input, shape index: {}]
  %s4 = inlined_call_operand.hbm [shape: f32[8,256], index: 4, kind: input, shape index: {}]
  %s5 = inlined_call_operand.vmem [shape: f32[1,256], index: 5, kind: input, shape index: {}]
  %s6 = inlined_call_operand.vmem [shape: f32[1,256], index: 6, kind: input, shape index: {}]
  %s7 = inlined_call_operand.hbm [shape: f32[16,256], index: 7, kind: output, shape index: {0}]
  %s8 = inlined_call_operand.hbm [shape: f32[16,256], index: 8, kind: output, shape index: {1}]
  %s9 = inlined_call_operand.hbm [shape: f32[16,256], index: 9, kind: output, shape index: {2}]
  %10 = xla_tuple %s7, %s8, %s9
  %s11 = sld [smem:[#allocation0]]
  $region66: #{tpu_custom_call.1} parent=0
    _
  %s13 = ssub.s32 1, %s11
  %s14 = scalar_select 0, %s13, %s11
  $region1: #{tpu_custom_call.1} parent=0
    #allocation2 [shape = 'u8[16384]{0}', space=vmem, size = 0x4000, scoped, tag = 'input window, operand 2, single buffered']
    #allocation3 [shape = 's32[1]{0}', space=sflag, size = 0x4, scoped, tag = 'scoped memory for tpu_custom_call.1']
    #allocation4 [shape = 's32[1]{0}', space=sflag, size = 0x4, scoped, tag = 'scoped memory for tpu_custom_call.1']
    #allocation5 [shape = 'u8[8192]{0}', space=vmem, size = 0x2000, scoped, tag = 'input window, operand 3, single buffered']
    #allocation6 [shape = 's32[1]{0}', space=sflag, size = 0x4, scoped, tag = 'scoped memory for tpu_custom_call.1']
    #allocation7 [shape = 'u8[8192]{0}', space=vmem, size = 0x2000, scoped, tag = 'input window, operand 4, single buffered']
    #allocation8 [shape = 'u8[16384]{0}', space=vmem, size = 0x4000, scoped, tag = 'output window, operand 0, single buffered']
    #allocation9 [shape = 'u8[16384]{0}', space=vmem, size = 0x4000, scoped, tag = 'output window, operand 1, single buffered']
    #allocation10 [shape = 's32[1]{0}', space=sflag, size = 0x4, scoped, tag = 'scoped memory for tpu_custom_call.1']
    #allocation11 [shape = 'u8[16384]{0}', space=vmem, size = 0x4000, scoped, tag = 'output window, operand 2, single buffered']
    %15 = vsyncpa [#allocation3], 0
    %16 = vsyncpa [#allocation6], 0
    %17 = vsyncpa [#allocation4], 0
    %18 = vsyncpa [#allocation10], 0
    // Predicated region
    $region2: #{tpu_custom_call.1} parent=1 // pred_check
      _
    $region3: #{tpu_custom_call.1} parent=1 // pred_check_branch
      %20 = sbr.rel (0) target = $region5
    $region4: #{tpu_custom_call.1} parent=1 // pred_region
      _
    $region5: #{tpu_custom_call.1} parent=1 // pred_fallthru
      _
    // Predicated region
    $region6: #{tpu_custom_call.1} parent=1 // pred_check
      _
    $region7: #{tpu_custom_call.1} parent=1 // pred_check_branch
      %22 = sbr.rel (0) target = $region9
    $region8: #{tpu_custom_call.1} parent=1 // pred_region
      _
    $region9: #{tpu_custom_call.1} parent=1 // pred_fallthru
      _
    // Predicated region
    $region10: #{tpu_custom_call.1} parent=1 // pred_check
      _
    $region11: #{tpu_custom_call.1} parent=1 // pred_check_branch
      %24 = sbr.rel (0) target = $region13
    $region12: #{tpu_custom_call.1} parent=1 // pred_region
      %26 = vsyncadd [#allocation3], 0
      %s27 = sshll.u32 %s2, 4
      %s28 = int_to_ptr.hbm [resolvable:$true] %s27
      %s29 = sshll.u32 [#allocation2], 4
      %s30 = int_to_ptr.vmem [resolvable:$true] %s29
      %35 = dma.hbm_to_vmem [thread:$0]  %s28, 512, %s30, [#allocation3], 256, 256, 16
    $region13: #{tpu_custom_call.1} parent=1 // pred_fallthru
      _
    // Predicated region
    $region14: #{tpu_custom_call.1} parent=1 // pred_check
      _
    $region15: #{tpu_custom_call.1} parent=1 // pred_check_branch
      %37 = sbr.rel (0) target = $region17
    $region16: #{tpu_custom_call.1} parent=1 // pred_region
      %39 = vsyncadd [#allocation6], 0
      %s41 = sshll.u32 %s3, 4
      %s42 = int_to_ptr.hbm [resolvable:$true] %s41
      %s43 = sshll.u32 [#allocation5], 4
      %s44 = int_to_ptr.vmem [resolvable:$true] %s43
      %46 = dma.hbm_to_vmem [thread:$0]  %s42, 256, %s44, [#allocation6]
    $region17: #{tpu_custom_call.1} parent=1 // pred_fallthru
      _
    // Predicated region
    $region18: #{tpu_custom_call.1} parent=1 // pred_check
      _
    $region19: #{tpu_custom_call.1} parent=1 // pred_check_branch
      %48 = sbr.rel (0) target = $region21
    $region20: #{tpu_custom_call.1} parent=1 // pred_region
      %50 = vsyncadd [#allocation6], 0
      %s52 = sshll.u32 %s4, 4
      %s53 = int_to_ptr.hbm [resolvable:$true] %s52
      %s54 = sshll.u32 [#allocation7], 4
      %s55 = int_to_ptr.vmem [resolvable:$true] %s54
      %57 = dma.hbm_to_vmem [thread:$0]  %s53, 256, %s55, [#allocation6]
    $region21: #{tpu_custom_call.1} parent=1 // pred_fallthru
      _
    // Predicated region
    $region22: #{tpu_custom_call.1} parent=1 // pred_check
      _
    $region23: #{tpu_custom_call.1} parent=1 // pred_check_branch
      %59 = sbr.rel (0) target = $region25
    $region24: #{tpu_custom_call.1} parent=1 // pred_region
      _
    $region25: #{tpu_custom_call.1} parent=1 // pred_fallthru
      _
    // Predicated region
    $region26: #{tpu_custom_call.1} parent=1 // pred_check
      _
    $region27: #{tpu_custom_call.1} parent=1 // pred_check_branch
      %61 = sbr.rel (0) target = $region29
    $region28: #{tpu_custom_call.1} parent=1 // pred_region
      _
    $region29: #{tpu_custom_call.1} parent=1 // pred_fallthru
      _
    // Predicated region
    $region30: #{tpu_custom_call.1} parent=1 // pred_check
      _
    $region31: #{tpu_custom_call.1} parent=1 // pred_check_branch
      %63 = sbr.rel (0) target = $region33
    $region32: #{tpu_custom_call.1} parent=1 // pred_region
      %65 = dma.done [#allocation3], 512
    $region33: #{tpu_custom_call.1} parent=1 // pred_fallthru
      _
    // Predicated region
    $region34: #{tpu_custom_call.1} parent=1 // pred_check
      _
    $region35: #{tpu_custom_call.1} parent=1 // pred_check_branch
      %67 = sbr.rel (0) target = $region37
    $region36: #{tpu_custom_call.1} parent=1 // pred_region
      %69 = dma.done [#allocation6], 256
    $region37: #{tpu_custom_call.1} parent=1 // pred_fallthru
      _
    // Predicated region
    $region38: #{tpu_custom_call.1} parent=1 // pred_check
      _
    $region39: #{tpu_custom_call.1} parent=1 // pred_check_branch
      %71 = sbr.rel (0) target = $region41
    $region40: #{tpu_custom_call.1} parent=1 // pred_region
      %73 = dma.done [#allocation6], 256
    $region41: #{tpu_custom_call.1} parent=1 // pred_fallthru
      _
    %v74 = vld [vmem:[%s0] sm:$0xff]
    %v75 = vld [vmem:[%s0 + $0x8] sm:$0xff]
    %v76 = vld [vmem:[%s1] sm:$0xff]
    %v77 = vld [vmem:[%s1 + $0x8] sm:$0xff]
    %v78 = vld [vmem:[#allocation5] sm:$0xff]
    %v79 = vld [vmem:[#allocation5 + $0x8] sm:$0xff]
    %vm80 = vcmask 64512
    %v82 = vsel %vm80, %v74, 0
    %v85 = vsel %vm80, %v75, 0
    %87 = vmatpush.msra.mxu0 0.0
    %88 = vmatpush.msra.mxu0 0.0
    %89 = vmatpush.msra.mxu0 0.0
    %90 = vmatpush.msra.mxu0 0.0
    %91 = vmatpush.msra.mxu0 0.0
    %92 = vmatpush.msra.mxu0 0.0
    %93 = vmatpush.msra.mxu0 0.0
    %94 = vmatpush.msra.mxu0 0.0
    %95 = vmatpush.msra.mxu0 0.0
    %96 = vmatpush.msra.mxu0 0.0
    %97 = vmatpush.msra.mxu0 0.0
    %98 = vmatpush.msra.mxu0 0.0
    %99 = vmatpush.msra.mxu0 0.0
    %100 = vmatpush.msra.mxu0 0.0
    %101 = vmatpush.msra.mxu0 0.0
    %102 = vmatpush.msra.mxu0 %v78
    %103 = vmatmul.f32.gmra.mxu0 %v82
    %v104 = vpop.f32.mrf.mxu0
    %v105 = vadd.f32 0.0, %v104
    %106 = vmatmul.f32.gmra.mxu0 %v85
    %v107 = vpop.f32.mrf.mxu0
    %v108 = vadd.f32 0.0, %v107
    %109 = vdwg.mxu0
    %110 = vmatpush.msra.mxu0 0.0
    %111 = vmatpush.msra.mxu0 0.0
    %112 = vmatpush.msra.mxu0 0.0
    %113 = vmatpush.msra.mxu0 0.0
    %114 = vmatpush.msra.mxu0 0.0
    %115 = vmatpush.msra.mxu0 0.0
    %116 = vmatpush.msra.mxu0 0.0
    %117 = vmatpush.msra.mxu0 0.0
    %118 = vmatpush.msra.mxu0 0.0
    %119 = vmatpush.msra.mxu0 0.0
    %120 = vmatpush.msra.mxu0 0.0
    %121 = vmatpush.msra.mxu0 0.0
    %122 = vmatpush.msra.mxu0 0.0
    %123 = vmatpush.msra.mxu0 0.0
    %124 = vmatpush.msra.mxu0 0.0
    %125 = vmatpush.msra.mxu0 %v79
    %126 = vmatmul.f32.gmra.mxu0 %v82
    %v127 = vpop.f32.mrf.mxu0
    %v128 = vadd.f32 0.0, %v127
    %129 = vmatmul.f32.gmra.mxu0 %v85
    %v130 = vpop.f32.mrf.mxu0
    %v131 = vadd.f32 0.0, %v130
    %132 = vdwg.mxu0
    %v133 = vld [vmem:[#allocation7] sm:$0xff]
    %v134 = vld [vmem:[#allocation7 + $0x8] sm:$0xff]
    %135 = vmatpush.msra.mxu0 0.0
    %136 = vmatpush.msra.mxu0 0.0
    %137 = vmatpush.msra.mxu0 0.0
    %138 = vmatpush.msra.mxu0 0.0
    %139 = vmatpush.msra.mxu0 0.0
    %140 = vmatpush.msra.mxu0 0.0
    %141 = vmatpush.msra.mxu0 0.0
    %142 = vmatpush.msra.mxu0 0.0
    %143 = vmatpush.msra.mxu0 0.0
    %144 = vmatpush.msra.mxu0 0.0
    %145 = vmatpush.msra.mxu0 0.0
    %146 = vmatpush.msra.mxu0 0.0
    %147 = vmatpush.msra.mxu0 0.0
    %148 = vmatpush.msra.mxu0 0.0
    %149 = vmatpush.msra.mxu0 0.0
    %150 = vmatpush.msra.mxu0 %v133
    %151 = vmatmul.f32.gmra.mxu0 %v82
    %v152 = vpop.f32.mrf.mxu0
    %v153 = vadd.f32 0.0, %v152
    %154 = vmatmul.f32.gmra.mxu0 %v85
    %v155 = vpop.f32.mrf.mxu0
    %v156 = vadd.f32 0.0, %v155
    %157 = vdwg.mxu0
    %158 = vmatpush.msra.mxu0 0.0
    %159 = vmatpush.msra.mxu0 0.0
    %160 = vmatpush.msra.mxu0 0.0
    %161 = vmatpush.msra.mxu0 0.0
    %162 = vmatpush.msra.mxu0 0.0
    %163 = vmatpush.msra.mxu0 0.0
    %164 = vmatpush.msra.mxu0 0.0
    %165 = vmatpush.msra.mxu0 0.0
    %166 = vmatpush.msra.mxu0 0.0
    %167 = vmatpush.msra.mxu0 0.0
    %168 = vmatpush.msra.mxu0 0.0
    %169 = vmatpush.msra.mxu0 0.0
    %170 = vmatpush.msra.mxu0 0.0
    %171 = vmatpush.msra.mxu0 0.0
    %172 = vmatpush.msra.mxu0 0.0
    %173 = vmatpush.msra.mxu0 %v134
    %174 = vmatmul.f32.gmra.mxu0 %v82
    %v175 = vpop.f32.mrf.mxu0
    %v176 = vadd.f32 0.0, %v175
    %177 = vmatmul.f32.gmra.mxu0 %v85
    %v178 = vpop.f32.mrf.mxu0
    %v179 = vadd.f32 0.0, %v178
    %180 = vdwg.mxu0
    %v181 = vsub.f32 0.0, %v105
    %v182 = vsub.f32 0.0, %v128
    %v183 = vsub.f32 0.0, %v108
    %v184 = vsub.f32 0.0, %v131
    %v185 = vmul.f32 %v181, 1.442695
    %v186 = vpow.pop %v185
    %v187 = vmul.f32 %v182, 1.442695
    %v188 = vpow.pop %v187
    %v189 = vmul.f32 %v183, 1.442695
    %v190 = vpow.pop %v189
    %v191 = vmul.f32 %v184, 1.442695
    %v192 = vpow.pop %v191
    %v193 = vand.u32 2147483647, %v153
    %vm194 = vcmp.le.f32.partialorder %v193, 0.7853982
    %vm195 = vcmp.lt.s32.totalorder %v153, 0
    %v196 = vand.u32 %v153, 2139095040
    %v197 = vshrl.u32 %v196, 23
    %v198 = vsub.s32 %v197, 127
    %v199 = vand.u32 2147483647, %v153
    %v200 = vand.u32 %v199, 8388607
    %v201 = vor.u32 %v200, 8388608
    %v202 = vsub.s32 0, %v201
    %v203 = vadd.s32 %v198, 1
    %vm204 = vcmp.gt.s32.totalorder %v203, 0
    %v205 = vsel %vm204, %v203, 0
    %v206 = vshrl.u32 %v205, 5
    %v207 = vand.u32 %v205, 31
    %v208 = vsub.s32 32, %v207
    %v209 = vshrl.u32 683565275, %v208
    %v210 = vshll.u32 683565275, %v207
    %v211 = vshrl.u32 2475754826, %v208
    %v212 = vor.u32 %v210, %v211
    %v213 = vshll.u32 2475754826, %v207
    %v214 = vshrl.u32 2131351028, %v208
    %v215 = vor.u32 %v213, %v214
    %v216 = vshll.u32 2131351028, %v207
    %v217 = vshrl.u32 2102212464, %v208
    %v218 = vor.u32 %v216, %v217
    %v219 = vshll.u32 2102212464, %v207
    %v220 = vshrl.u32 920167782, %v208
    %v221 = vor.u32 %v219, %v220
    %v222 = vshll.u32 920167782, %v207
    %v223 = vshrl.u32 1326507024, %v208
    %v224 = vor.u32 %v222, %v223
    %vm225 = vcmp.lt.s32.totalorder %v206, 1
    %vm226 = vcmp.lt.s32.totalorder %v206, 2
    %vm227 = vcmp.lt.s32.totalorder %v206, 3
    %vm228 = vcmp.lt.s32.totalorder %v206, 4
    %v229 = vsel %vm225, %v209, %v212
    %v230 = vsel %vm228, %v218, 2102212464
    %v231 = vsel %vm227, %v215, %v230
    %v232 = vsel %vm226, %v229, %v231
    %v233 = vsel %vm225, %v212, %v215
    %v234 = vsel %vm228, %v221, 920167782
    %v235 = vsel %vm227, %v218, %v234
    %v236 = vsel %vm226, %v233, %v235
    %v237 = vsel %vm225, %v215, %v218
    %v238 = vsel %vm228, %v224, 1326507024
    %v239 = vsel %vm227, %v221, %v238
    %v240 = vsel %vm226, %v237, %v239
    %v241 = vshll.u32 %v201, 8
    %v242 = vand.u32 %v241, 65535
    %v243 = vshrl.u32 %v241, 16
    %v244 = vand.u32 %v240, 65535
    %v245 = vshrl.u32 %v240, 16
    %v246 = vmul.u32 %v242, %v244
    %v247 = vmul.u32 %v242, %v245
    %v248 = vmul.u32 %v243, %v244
    %v249 = vmul.u32 %v243, %v245
    %v250 = vshll.u32 %v247, 16
    %v251 = vshrl.u32 %v247, 16
    %v252 = vshll.u32 %v248, 16
    %v253 = vshrl.u32 %v248, 16
    %vm254 = vc.u32 %v246, %v250
    %v255 = vsel %vm254, 1, 0
    %v256 = vadd.s32 %v246, %v250
    %v257 = vadd.s32 %v249, %v255
    %vm258 = vc.u32 %v256, %v252
    %v259 = vsel %vm258, 1, 0
    %v260 = vadd.s32 %v256, %v252
    %v261 = vadd.s32 %v257, %v259
    %v262 = vadd.s32 %v261, %v251
    %v263 = vadd.s32 %v262, %v253
    %v264 = vand.u32 %v241, 65535
    %v265 = vshrl.u32 %v241, 16
    %v266 = vand.u32 %v236, 65535
    %v267 = vshrl.u32 %v236, 16
    %v268 = vmul.u32 %v264, %v266
    %v269 = vmul.u32 %v264, %v267
    %v270 = vmul.u32 %v265, %v266
    %v271 = vmul.u32 %v265, %v267
    %v272 = vshll.u32 %v269, 16
    %v273 = vshrl.u32 %v269, 16
    %v274 = vshll.u32 %v270, 16
    %v275 = vshrl.u32 %v270, 16
    %vm276 = vc.u32 %v268, %v272
    %v277 = vsel %vm276, 1, 0
    %v278 = vadd.s32 %v268, %v272
    %v279 = vadd.s32 %v271, %v277
    %vm280 = vc.u32 %v278, %v274
    %v281 = vsel %vm280, 1, 0
    %v282 = vadd.s32 %v278, %v274
    %v283 = vadd.s32 %v279, %v281
    %v284 = vadd.s32 %v283, %v273
    %v285 = vadd.s32 %v284, %v275
    %v286 = vmul.u32 %v241, %v232
    %v287 = vadd.s32 %v263, %v282
    %vm288 = vc.u32 %v263, %v282
    %v289 = vadd.s32 %v285, 1
    %v290 = vsel %vm288, %v289, %v285
    %v291 = vadd.s32 %v286, %v290
    %v292 = vadd.s32 %v291, 536870912
    %v293 = vshrl.u32 %v292, 30
    %v294 = vshll.u32 %v293, 30
    %v295 = vsub.s32 %v291, %v294
    %vm296 = vcmp.lt.s32.totalorder %v295, 0
    %v297 = vsub.s32 0, %v295
    %v298 = vsel %vm296, %v297, %v295
    %v299 = vclz %v298
    %v300 = vsub.s32 %v299, 2
    %vm301 = vcmp.gt.s32.totalorder 0, %v300
    %v302 = vsel %vm301, 0, %v300
    %v303 = vsub.s32 32, %v302
    %v304 = vshll.u32 %v295, %v302
    %v305 = vshrl.u32 %v287, %v303
    %v306 = vor.u32 %v304, %v305
    %v307 = vsub.s32 4294967266, %v302
    %v308 = vadd.s32 %v307, 127
    %v309 = vshll.u32 %v308, 23
    %v310 = vor.u32 4788187, %v309
    %v311 = vand.u32 2147483647, %v310
    %v313 = vcvt.s32.f32 %v306
    %v314 = vmul.f32 %v313, %v311
    %v315 = vxor.u32 %v314, 2147483648
    %v316 = vsel %vm195, %v315, %v314
    %v317 = vsub.s32 4, %v293
    %v318 = vsel %vm195, %v317, %v293
    %v319 = vsel %vm194, %v153, %v316
    %v320 = vsel %vm194, 0, %v318
    %v321 = vmul.f32 %v319, %v319
    %v322 = vmul.f32 %v321, -0.001358992
    %v323 = vadd.f32 %v322, 0.041655596
    %v324 = vmul.f32 %v321, %v323
    %v325 = vadd.f32 %v324, -0.4999988
    %v326 = vmul.f32 %v321, %v325
    %v327 = vadd.f32 1.0, %v326
    %v328 = vmul.f32 %v319, %v319
    %v329 = vmul.f32 %v328, -0.00019511016
    %v330 = vadd.f32 %v329, 0.008332121
    %v331 = vmul.f32 %v328, %v330
    %v332 = vadd.f32 %v331, -0.16666654
    %v333 = vmul.f32 %v328, %v332
    %v334 = vadd.f32 %v333, 1.0
    %v335 = vmul.f32 %v334, %v319
    %vm336 = vweird.f32 %v153
    %v337 = vand.u32 %v320, 3
    %vm338 = vcmp.lt.s32.totalorder %v337, 2
    %vm339 = vcmp.eq.s32.totalorder %v337, 0
    %v340 = vxor.u32 %v335, 2147483648
    %v341 = vsel %vm339, %v327, %v340
    %vm342 = vcmp.eq.s32.totalorder %v337, 2
    %v343 = vxor.u32 %v327, 2147483648
    %v344 = vsel %vm342, %v343, %v335
    %v345 = vsel %vm338, %v341, %v344
    %v346 = vsel %vm336, nan, %v345
    %v347 = vand.u32 2147483647, %v176
    %vm348 = vcmp.le.f32.partialorder %v347, 0.7853982
    %vm349 = vcmp.lt.s32.totalorder %v176, 0
    %v350 = vand.u32 %v176, 2139095040
    %v351 = vshrl.u32 %v350, 23
    %v352 = vsub.s32 %v351, 127
    %v353 = vand.u32 2147483647, %v176
    %v354 = vand.u32 %v353, 8388607
    %v355 = vor.u32 %v354, 8388608
    %v356 = vsub.s32 0, %v355
    %v357 = vadd.s32 %v352, 1
    %vm358 = vcmp.gt.s32.totalorder %v357, 0
    %v359 = vsel %vm358, %v357, 0
    %v360 = vshrl.u32 %v359, 5
    %v361 = vand.u32 %v359, 31
    %v362 = vsub.s32 32, %v361
    %v363 = vshrl.u32 683565275, %v362
    %v364 = vshll.u32 683565275, %v361
    %v365 = vshrl.u32 2475754826, %v362
    %v366 = vor.u32 %v364, %v365
    %v367 = vshll.u32 2475754826, %v361
    %v368 = vshrl.u32 2131351028, %v362
    %v369 = vor.u32 %v367, %v368
    %v370 = vshll.u32 2131351028, %v361
    %v371 = vshrl.u32 2102212464, %v362
    %v372 = vor.u32 %v370, %v371
    %v373 = vshll.u32 2102212464, %v361
    %v374 = vshrl.u32 920167782, %v362
    %v375 = vor.u32 %v373, %v374
    %v376 = vshll.u32 920167782, %v361
    %v377 = vshrl.u32 1326507024, %v362
    %v378 = vor.u32 %v376, %v377
    %vm379 = vcmp.lt.s32.totalorder %v360, 1
    %vm380 = vcmp.lt.s32.totalorder %v360, 2
    %vm381 = vcmp.lt.s32.totalorder %v360, 3
    %vm382 = vcmp.lt.s32.totalorder %v360, 4
    %v383 = vsel %vm379, %v363, %v366
    %v384 = vsel %vm382, %v372, 2102212464
    %v385 = vsel %vm381, %v369, %v384
    %v386 = vsel %vm380, %v383, %v385
    %v387 = vsel %vm379, %v366, %v369
    %v388 = vsel %vm382, %v375, 920167782
    %v389 = vsel %vm381, %v372, %v388
    %v390 = vsel %vm380, %v387, %v389
    %v391 = vsel %vm379, %v369, %v372
    %v392 = vsel %vm382, %v378, 1326507024
    %v393 = vsel %vm381, %v375, %v392
    %v394 = vsel %vm380, %v391, %v393
    %v395 = vshll.u32 %v355, 8
    %v396 = vand.u32 %v395, 65535
    %v397 = vshrl.u32 %v395, 16
    %v398 = vand.u32 %v394, 65535
    %v399 = vshrl.u32 %v394, 16
    %v400 = vmul.u32 %v396, %v398
    %v401 = vmul.u32 %v396, %v399
    %v402 = vmul.u32 %v397, %v398
    %v403 = vmul.u32 %v397, %v399
    %v404 = vshll.u32 %v401, 16
    %v405 = vshrl.u32 %v401, 16
    %v406 = vshll.u32 %v402, 16
    %v407 = vshrl.u32 %v402, 16
    %vm408 = vc.u32 %v400, %v404
    %v409 = vsel %vm408, 1, 0
    %v410 = vadd.s32 %v400, %v404
    %v411 = vadd.s32 %v403, %v409
    %vm412 = vc.u32 %v410, %v406
    %v413 = vsel %vm412, 1, 0
    %v414 = vadd.s32 %v410, %v406
    %v415 = vadd.s32 %v411, %v413
    %v416 = vadd.s32 %v415, %v405
    %v417 = vadd.s32 %v416, %v407
    %v418 = vand.u32 %v395, 65535
    %v419 = vshrl.u32 %v395, 16
    %v420 = vand.u32 %v390, 65535
    %v421 = vshrl.u32 %v390, 16
    %v422 = vmul.u32 %v418, %v420
    %v423 = vmul.u32 %v418, %v421
    %v424 = vmul.u32 %v419, %v420
    %v425 = vmul.u32 %v419, %v421
    %v426 = vshll.u32 %v423, 16
    %v427 = vshrl.u32 %v423, 16
    %v428 = vshll.u32 %v424, 16
    %v429 = vshrl.u32 %v424, 16
    %vm430 = vc.u32 %v422, %v426
    %v431 = vsel %vm430, 1, 0
    %v432 = vadd.s32 %v422, %v426
    %v433 = vadd.s32 %v425, %v431
    %vm434 = vc.u32 %v432, %v428
    %v435 = vsel %vm434, 1, 0
    %v436 = vadd.s32 %v432, %v428
    %v437 = vadd.s32 %v433, %v435
    %v438 = vadd.s32 %v437, %v427
    %v439 = vadd.s32 %v438, %v429
    %v440 = vmul.u32 %v395, %v386
    %v441 = vadd.s32 %v417, %v436
    %vm442 = vc.u32 %v417, %v436
    %v443 = vadd.s32 %v439, 1
    %v444 = vsel %vm442, %v443, %v439
    %v445 = vadd.s32 %v440, %v444
    %v446 = vadd.s32 %v445, 536870912
    %v447 = vshrl.u32 %v446, 30
    %v448 = vshll.u32 %v447, 30
    %v449 = vsub.s32 %v445, %v448
    %vm450 = vcmp.lt.s32.totalorder %v449, 0
    %v451 = vsub.s32 0, %v449
    %v452 = vsel %vm450, %v451, %v449
    %v453 = vclz %v452
    %v454 = vsub.s32 %v453, 2
    %vm455 = vcmp.gt.s32.totalorder 0, %v454
    %v456 = vsel %vm455, 0, %v454
    %v457 = vsub.s32 32, %v456
    %v458 = vshll.u32 %v449, %v456
    %v459 = vshrl.u32 %v441, %v457
    %v460 = vor.u32 %v458, %v459
    %v461 = vsub.s32 4294967266, %v456
    %v462 = vadd.s32 %v461, 127
    %v463 = vshll.u32 %v462, 23
    %v464 = vor.u32 4788187, %v463
    %v465 = vand.u32 2147483647, %v464
    %v467 = vcvt.s32.f32 %v460
    %v468 = vmul.f32 %v467, %v465
    %v469 = vxor.u32 %v468, 2147483648
    %v470 = vsel %vm349, %v469, %v468
    %v471 = vsub.s32 4, %v447
    %v472 = vsel %vm349, %v471, %v447
    %v473 = vsel %vm348, %v176, %v470
    %v474 = vsel %vm348, 0, %v472
    %v475 = vmul.f32 %v473, %v473
    %v476 = vmul.f32 %v475, -0.001358992
    %v477 = vadd.f32 %v476, 0.041655596
    %v478 = vmul.f32 %v475, %v477
    %v479 = vadd.f32 %v478, -0.4999988
    %v480 = vmul.f32 %v475, %v479
    %v481 = vadd.f32 1.0, %v480
    %v482 = vmul.f32 %v473, %v473
    %v483 = vmul.f32 %v482, -0.00019511016
    %v484 = vadd.f32 %v483, 0.008332121
    %v485 = vmul.f32 %v482, %v484
    %v486 = vadd.f32 %v485, -0.16666654
    %v487 = vmul.f32 %v482, %v486
    %v488 = vadd.f32 %v487, 1.0
    %v489 = vmul.f32 %v488, %v473
    %vm490 = vweird.f32 %v176
    %v491 = vand.u32 %v474, 3
    %vm492 = vcmp.lt.s32.totalorder %v491, 2
    %vm493 = vcmp.eq.s32.totalorder %v491, 0
    %v494 = vxor.u32 %v489, 2147483648
    %v495 = vsel %vm493, %v481, %v494
    %vm496 = vcmp.eq.s32.totalorder %v491, 2
    %v497 = vxor.u32 %v481, 2147483648
    %v498 = vsel %vm496, %v497, %v489
    %v499 = vsel %vm492, %v495, %v498
    %v500 = vsel %vm490, nan, %v499
    %v501 = vand.u32 2147483647, %v156
    %vm502 = vcmp.le.f32.partialorder %v501, 0.7853982
    %vm503 = vcmp.lt.s32.totalorder %v156, 0
    %v504 = vand.u32 %v156, 2139095040
    %v505 = vshrl.u32 %v504, 23
    %v506 = vsub.s32 %v505, 127
    %v507 = vand.u32 2147483647, %v156
    %v508 = vand.u32 %v507, 8388607
    %v509 = vor.u32 %v508, 8388608
    %v510 = vsub.s32 0, %v509
    %v511 = vadd.s32 %v506, 1
    %vm512 = vcmp.gt.s32.totalorder %v511, 0
    %v513 = vsel %vm512, %v511, 0
    %v514 = vshrl.u32 %v513, 5
    %v515 = vand.u32 %v513, 31
    %v516 = vsub.s32 32, %v515
    %v517 = vshrl.u32 683565275, %v516
    %v518 = vshll.u32 683565275, %v515
    %v519 = vshrl.u32 2475754826, %v516
    %v520 = vor.u32 %v518, %v519
    %v521 = vshll.u32 2475754826, %v515
    %v522 = vshrl.u32 2131351028, %v516
    %v523 = vor.u32 %v521, %v522
    %v524 = vshll.u32 2131351028, %v515
    %v525 = vshrl.u32 2102212464, %v516
    %v526 = vor.u32 %v524, %v525
    %v527 = vshll.u32 2102212464, %v515
    %v528 = vshrl.u32 920167782, %v516
    %v529 = vor.u32 %v527, %v528
    %v530 = vshll.u32 920167782, %v515
    %v531 = vshrl.u32 1326507024, %v516
    %v532 = vor.u32 %v530, %v531
    %vm533 = vcmp.lt.s32.totalorder %v514, 1
    %vm534 = vcmp.lt.s32.totalorder %v514, 2
    %vm535 = vcmp.lt.s32.totalorder %v514, 3
    %vm536 = vcmp.lt.s32.totalorder %v514, 4
    %v537 = vsel %vm533, %v517, %v520
    %v538 = vsel %vm536, %v526, 2102212464
    %v539 = vsel %vm535, %v523, %v538
    %v540 = vsel %vm534, %v537, %v539
    %v541 = vsel %vm533, %v520, %v523
    %v542 = vsel %vm536, %v529, 920167782
    %v543 = vsel %vm535, %v526, %v542
    %v544 = vsel %vm534, %v541, %v543
    %v545 = vsel %vm533, %v523, %v526
    %v546 = vsel %vm536, %v532, 1326507024
    %v547 = vsel %vm535, %v529, %v546
    %v548 = vsel %vm534, %v545, %v547
    %v549 = vshll.u32 %v509, 8
    %v550 = vand.u32 %v549, 65535
    %v551 = vshrl.u32 %v549, 16
    %v552 = vand.u32 %v548, 65535
    %v553 = vshrl.u32 %v548, 16
    %v554 = vmul.u32 %v550, %v552
    %v555 = vmul.u32 %v550, %v553
    %v556 = vmul.u32 %v551, %v552
    %v557 = vmul.u32 %v551, %v553
    %v558 = vshll.u32 %v555, 16
    %v559 = vshrl.u32 %v555, 16
    %v560 = vshll.u32 %v556, 16
    %v561 = vshrl.u32 %v556, 16
    %vm562 = vc.u32 %v554, %v558
    %v563 = vsel %vm562, 1, 0
    %v564 = vadd.s32 %v554, %v558
    %v565 = vadd.s32 %v557, %v563
    %vm566 = vc.u32 %v564, %v560
    %v567 = vsel %vm566, 1, 0
    %v568 = vadd.s32 %v564, %v560
    %v569 = vadd.s32 %v565, %v567
    %v570 = vadd.s32 %v569, %v559
    %v571 = vadd.s32 %v570, %v561
    %v572 = vand.u32 %v549, 65535
    %v573 = vshrl.u32 %v549, 16
    %v574 = vand.u32 %v544, 65535
    %v575 = vshrl.u32 %v544, 16
    %v576 = vmul.u32 %v572, %v574
    %v577 = vmul.u32 %v572, %v575
    %v578 = vmul.u32 %v573, %v574
    %v579 = vmul.u32 %v573, %v575
    %v580 = vshll.u32 %v577, 16
    %v581 = vshrl.u32 %v577, 16
    %v582 = vshll.u32 %v578, 16
    %v583 = vshrl.u32 %v578, 16
    %vm584 = vc.u32 %v576, %v580
    %v585 = vsel %vm584, 1, 0
    %v586 = vadd.s32 %v576, %v580
    %v587 = vadd.s32 %v579, %v585
    %vm588 = vc.u32 %v586, %v582
    %v589 = vsel %vm588, 1, 0
    %v590 = vadd.s32 %v586, %v582
    %v591 = vadd.s32 %v587, %v589
    %v592 = vadd.s32 %v591, %v581
    %v593 = vadd.s32 %v592, %v583
    %v594 = vmul.u32 %v549, %v540
    %v595 = vadd.s32 %v571, %v590
    %vm596 = vc.u32 %v571, %v590
    %v597 = vadd.s32 %v593, 1
    %v598 = vsel %vm596, %v597, %v593
    %v599 = vadd.s32 %v594, %v598
    %v600 = vadd.s32 %v599, 536870912
    %v601 = vshrl.u32 %v600, 30
    %v602 = vshll.u32 %v601, 30
    %v603 = vsub.s32 %v599, %v602
    %vm604 = vcmp.lt.s32.totalorder %v603, 0
    %v605 = vsub.s32 0, %v603
    %v606 = vsel %vm604, %v605, %v603
    %v607 = vclz %v606
    %v608 = vsub.s32 %v607, 2
    %vm609 = vcmp.gt.s32.totalorder 0, %v608
    %v610 = vsel %vm609, 0, %v608
    %v611 = vsub.s32 32, %v610
    %v612 = vshll.u32 %v603, %v610
    %v613 = vshrl.u32 %v595, %v611
    %v614 = vor.u32 %v612, %v613
    %v615 = vsub.s32 4294967266, %v610
    %v616 = vadd.s32 %v615, 127
    %v617 = vshll.u32 %v616, 23
    %v618 = vor.u32 4788187, %v617
    %v619 = vand.u32 2147483647, %v618
    %v621 = vcvt.s32.f32 %v614
    %v622 = vmul.f32 %v621, %v619
    %v623 = vxor.u32 %v622, 2147483648
    %v624 = vsel %vm503, %v623, %v622
    %v625 = vsub.s32 4, %v601
    %v626 = vsel %vm503, %v625, %v601
    %v627 = vsel %vm502, %v156, %v624
    %v628 = vsel %vm502, 0, %v626
    %v629 = vmul.f32 %v627, %v627
    %v630 = vmul.f32 %v629, -0.001358992
    %v631 = vadd.f32 %v630, 0.041655596
    %v632 = vmul.f32 %v629, %v631
    %v633 = vadd.f32 %v632, -0.4999988
    %v634 = vmul.f32 %v629, %v633
    %v635 = vadd.f32 1.0, %v634
    %v636 = vmul.f32 %v627, %v627
    %v637 = vmul.f32 %v636, -0.00019511016
    %v638 = vadd.f32 %v637, 0.008332121
    %v639 = vmul.f32 %v636, %v638
    %v640 = vadd.f32 %v639, -0.16666654
    %v641 = vmul.f32 %v636, %v640
    %v642 = vadd.f32 %v641, 1.0
    %v643 = vmul.f32 %v642, %v627
    %vm644 = vweird.f32 %v156
    %v645 = vand.u32 %v628, 3
    %vm646 = vcmp.lt.s32.totalorder %v645, 2
    %vm647 = vcmp.eq.s32.totalorder %v645, 0
    %v648 = vxor.u32 %v643, 2147483648
    %v649 = vsel %vm647, %v635, %v648
    %vm650 = vcmp.eq.s32.totalorder %v645, 2
    %v651 = vxor.u32 %v635, 2147483648
    %v652 = vsel %vm650, %v651, %v643
    %v653 = vsel %vm646, %v649, %v652
    %v654 = vsel %vm644, nan, %v653
    %v655 = vand.u32 2147483647, %v179
    %vm656 = vcmp.le.f32.partialorder %v655, 0.7853982
    %vm657 = vcmp.lt.s32.totalorder %v179, 0
    %v658 = vand.u32 %v179, 2139095040
    %v659 = vshrl.u32 %v658, 23
    %v660 = vsub.s32 %v659, 127
    %v661 = vand.u32 2147483647, %v179
    %v662 = vand.u32 %v661, 8388607
    %v663 = vor.u32 %v662, 8388608
    %v664 = vsub.s32 0, %v663
    %v665 = vadd.s32 %v660, 1
    %vm666 = vcmp.gt.s32.totalorder %v665, 0
    %v667 = vsel %vm666, %v665, 0
    %v668 = vshrl.u32 %v667, 5
    %v669 = vand.u32 %v667, 31
    %v670 = vsub.s32 32, %v669
    %v671 = vshrl.u32 683565275, %v670
    %v672 = vshll.u32 683565275, %v669
    %v673 = vshrl.u32 2475754826, %v670
    %v674 = vor.u32 %v672, %v673
    %v675 = vshll.u32 2475754826, %v669
    %v676 = vshrl.u32 2131351028, %v670
    %v677 = vor.u32 %v675, %v676
    %v678 = vshll.u32 2131351028, %v669
    %v679 = vshrl.u32 2102212464, %v670
    %v680 = vor.u32 %v678, %v679
    %v681 = vshll.u32 2102212464, %v669
    %v682 = vshrl.u32 920167782, %v670
    %v683 = vor.u32 %v681, %v682
    %v684 = vshll.u32 920167782, %v669
    %v685 = vshrl.u32 1326507024, %v670
    %v686 = vor.u32 %v684, %v685
    %vm687 = vcmp.lt.s32.totalorder %v668, 1
    %vm688 = vcmp.lt.s32.totalorder %v668, 2
    %vm689 = vcmp.lt.s32.totalorder %v668, 3
    %vm690 = vcmp.lt.s32.totalorder %v668, 4
    %v691 = vsel %vm687, %v671, %v674
    %v692 = vsel %vm690, %v680, 2102212464
    %v693 = vsel %vm689, %v677, %v692
    %v694 = vsel %vm688, %v691, %v693
    %v695 = vsel %vm687, %v674, %v677
    %v696 = vsel %vm690, %v683, 920167782
    %v697 = vsel %vm689, %v680, %v696
    %v698 = vsel %vm688, %v695, %v697
    %v699 = vsel %vm687, %v677, %v680
    %v700 = vsel %vm690, %v686, 1326507024
    %v701 = vsel %vm689, %v683, %v700
    %v702 = vsel %vm688, %v699, %v701
    %v703 = vshll.u32 %v663, 8
    %v704 = vand.u32 %v703, 65535
    %v705 = vshrl.u32 %v703, 16
    %v706 = vand.u32 %v702, 65535
    %v707 = vshrl.u32 %v702, 16
    %v708 = vmul.u32 %v704, %v706
    %v709 = vmul.u32 %v704, %v707
    %v710 = vmul.u32 %v705, %v706
    %v711 = vmul.u32 %v705, %v707
    %v712 = vshll.u32 %v709, 16
    %v713 = vshrl.u32 %v709, 16
    %v714 = vshll.u32 %v710, 16
    %v715 = vshrl.u32 %v710, 16
    %vm716 = vc.u32 %v708, %v712
    %v717 = vsel %vm716, 1, 0
    %v718 = vadd.s32 %v708, %v712
    %v719 = vadd.s32 %v711, %v717
    %vm720 = vc.u32 %v718, %v714
    %v721 = vsel %vm720, 1, 0
    %v722 = vadd.s32 %v718, %v714
    %v723 = vadd.s32 %v719, %v721
    %v724 = vadd.s32 %v723, %v713
    %v725 = vadd.s32 %v724, %v715
    %v726 = vand.u32 %v703, 65535
    %v727 = vshrl.u32 %v703, 16
    %v728 = vand.u32 %v698, 65535
    %v729 = vshrl.u32 %v698, 16
    %v730 = vmul.u32 %v726, %v728
    %v731 = vmul.u32 %v726, %v729
    %v732 = vmul.u32 %v727, %v728
    %v733 = vmul.u32 %v727, %v729
    %v734 = vshll.u32 %v731, 16
    %v735 = vshrl.u32 %v731, 16
    %v736 = vshll.u32 %v732, 16
    %v737 = vshrl.u32 %v732, 16
    %vm738 = vc.u32 %v730, %v734
    %v739 = vsel %vm738, 1, 0
    %v740 = vadd.s32 %v730, %v734
    %v741 = vadd.s32 %v733, %v739
    %vm742 = vc.u32 %v740, %v736
    %v743 = vsel %vm742, 1, 0
    %v744 = vadd.s32 %v740, %v736
    %v745 = vadd.s32 %v741, %v743
    %v746 = vadd.s32 %v745, %v735
    %v747 = vadd.s32 %v746, %v737
    %v748 = vmul.u32 %v703, %v694
    %v749 = vadd.s32 %v725, %v744
    %vm750 = vc.u32 %v725, %v744
    %v751 = vadd.s32 %v747, 1
    %v752 = vsel %vm750, %v751, %v747
    %v753 = vadd.s32 %v748, %v752
    %v754 = vadd.s32 %v753, 536870912
    %v755 = vshrl.u32 %v754, 30
    %v756 = vshll.u32 %v755, 30
    %v757 = vsub.s32 %v753, %v756
    %vm758 = vcmp.lt.s32.totalorder %v757, 0
    %v759 = vsub.s32 0, %v757
    %v760 = vsel %vm758, %v759, %v757
    %v761 = vclz %v760
    %v762 = vsub.s32 %v761, 2
    %vm763 = vcmp.gt.s32.totalorder 0, %v762
    %v764 = vsel %vm763, 0, %v762
    %v765 = vsub.s32 32, %v764
    %v766 = vshll.u32 %v757, %v764
    %v767 = vshrl.u32 %v749, %v765
    %v768 = vor.u32 %v766, %v767
    %v769 = vsub.s32 4294967266, %v764
    %v770 = vadd.s32 %v769, 127
    %v771 = vshll.u32 %v770, 23
    %v772 = vor.u32 4788187, %v771
    %v773 = vand.u32 2147483647, %v772
    %v775 = vcvt.s32.f32 %v768
    %v776 = vmul.f32 %v775, %v773
    %v777 = vxor.u32 %v776, 2147483648
    %v778 = vsel %vm657, %v777, %v776
    %v779 = vsub.s32 4, %v755
    %v780 = vsel %vm657, %v779, %v755
    %v781 = vsel %vm656, %v179, %v778
    %v782 = vsel %vm656, 0, %v780
    %v783 = vmul.f32 %v781, %v781
    %v784 = vmul.f32 %v783, -0.001358992
    %v785 = vadd.f32 %v784, 0.041655596
    %v786 = vmul.f32 %v783, %v785
    %v787 = vadd.f32 %v786, -0.4999988
    %v788 = vmul.f32 %v783, %v787
    %v789 = vadd.f32 1.0, %v788
    %v790 = vmul.f32 %v781, %v781
    %v791 = vmul.f32 %v790, -0.00019511016
    %v792 = vadd.f32 %v791, 0.008332121
    %v793 = vmul.f32 %v790, %v792
    %v794 = vadd.f32 %v793, -0.16666654
    %v795 = vmul.f32 %v790, %v794
    %v796 = vadd.f32 %v795, 1.0
    %v797 = vmul.f32 %v796, %v781
    %vm798 = vweird.f32 %v179
    %v799 = vand.u32 %v782, 3
    %vm800 = vcmp.lt.s32.totalorder %v799, 2
    %vm801 = vcmp.eq.s32.totalorder %v799, 0
    %v802 = vxor.u32 %v797, 2147483648
    %v803 = vsel %vm801, %v789, %v802
    %vm804 = vcmp.eq.s32.totalorder %v799, 2
    %v805 = vxor.u32 %v789, 2147483648
    %v806 = vsel %vm804, %v805, %v797
    %v807 = vsel %vm800, %v803, %v806
    %v808 = vsel %vm798, nan, %v807
    %v809 = vand.u32 2147483647, %v153
    %vm810 = vcmp.le.f32.partialorder %v809, 0.7853982
    %vm811 = vcmp.lt.s32.totalorder %v153, 0
    %v812 = vand.u32 %v153, 2139095040
    %v813 = vshrl.u32 %v812, 23
    %v814 = vsub.s32 %v813, 127
    %v815 = vand.u32 2147483647, %v153
    %v816 = vand.u32 %v815, 8388607
    %v817 = vor.u32 %v816, 8388608
    %v818 = vsub.s32 0, %v817
    %v819 = vadd.s32 %v814, 1
    %vm820 = vcmp.gt.s32.totalorder %v819, 0
    %v821 = vsel %vm820, %v819, 0
    %v822 = vshrl.u32 %v821, 5
    %v823 = vand.u32 %v821, 31
    %v824 = vsub.s32 32, %v823
    %v825 = vshrl.u32 683565275, %v824
    %v826 = vshll.u32 683565275, %v823
    %v827 = vshrl.u32 2475754826, %v824
    %v828 = vor.u32 %v826, %v827
    %v829 = vshll.u32 2475754826, %v823
    %v830 = vshrl.u32 2131351028, %v824
    %v831 = vor.u32 %v829, %v830
    %v832 = vshll.u32 2131351028, %v823
    %v833 = vshrl.u32 2102212464, %v824
    %v834 = vor.u32 %v832, %v833
    %v835 = vshll.u32 2102212464, %v823
    %v836 = vshrl.u32 920167782, %v824
    %v837 = vor.u32 %v835, %v836
    %v838 = vshll.u32 920167782, %v823
    %v839 = vshrl.u32 1326507024, %v824
    %v840 = vor.u32 %v838, %v839
    %vm841 = vcmp.lt.s32.totalorder %v822, 1
    %vm842 = vcmp.lt.s32.totalorder %v822, 2
    %vm843 = vcmp.lt.s32.totalorder %v822, 3
    %vm844 = vcmp.lt.s32.totalorder %v822, 4
    %v845 = vsel %vm841, %v825, %v828
    %v846 = vsel %vm844, %v834, 2102212464
    %v847 = vsel %vm843, %v831, %v846
    %v848 = vsel %vm842, %v845, %v847
    %v849 = vsel %vm841, %v828, %v831
    %v850 = vsel %vm844, %v837, 920167782
    %v851 = vsel %vm843, %v834, %v850
    %v852 = vsel %vm842, %v849, %v851
    %v853 = vsel %vm841, %v831, %v834
    %v854 = vsel %vm844, %v840, 1326507024
    %v855 = vsel %vm843, %v837, %v854
    %v856 = vsel %vm842, %v853, %v855
    %v857 = vshll.u32 %v817, 8
    %v858 = vand.u32 %v857, 65535
    %v859 = vshrl.u32 %v857, 16
    %v860 = vand.u32 %v856, 65535
    %v861 = vshrl.u32 %v856, 16
    %v862 = vmul.u32 %v858, %v860
    %v863 = vmul.u32 %v858, %v861
    %v864 = vmul.u32 %v859, %v860
    %v865 = vmul.u32 %v859, %v861
    %v866 = vshll.u32 %v863, 16
    %v867 = vshrl.u32 %v863, 16
    %v868 = vshll.u32 %v864, 16
    %v869 = vshrl.u32 %v864, 16
    %vm870 = vc.u32 %v862, %v866
    %v871 = vsel %vm870, 1, 0
    %v872 = vadd.s32 %v862, %v866
    %v873 = vadd.s32 %v865, %v871
    %vm874 = vc.u32 %v872, %v868
    %v875 = vsel %vm874, 1, 0
    %v876 = vadd.s32 %v872, %v868
    %v877 = vadd.s32 %v873, %v875
    %v878 = vadd.s32 %v877, %v867
    %v879 = vadd.s32 %v878, %v869
    %v880 = vand.u32 %v857, 65535
    %v881 = vshrl.u32 %v857, 16
    %v882 = vand.u32 %v852, 65535
    %v883 = vshrl.u32 %v852, 16
    %v884 = vmul.u32 %v880, %v882
    %v885 = vmul.u32 %v880, %v883
    %v886 = vmul.u32 %v881, %v882
    %v887 = vmul.u32 %v881, %v883
    %v888 = vshll.u32 %v885, 16
    %v889 = vshrl.u32 %v885, 16
    %v890 = vshll.u32 %v886, 16
    %v891 = vshrl.u32 %v886, 16
    %vm892 = vc.u32 %v884, %v888
    %v893 = vsel %vm892, 1, 0
    %v894 = vadd.s32 %v884, %v888
    %v895 = vadd.s32 %v887, %v893
    %vm896 = vc.u32 %v894, %v890
    %v897 = vsel %vm896, 1, 0
    %v898 = vadd.s32 %v894, %v890
    %v899 = vadd.s32 %v895, %v897
    %v900 = vadd.s32 %v899, %v889
    %v901 = vadd.s32 %v900, %v891
    %v902 = vmul.u32 %v857, %v848
    %v903 = vadd.s32 %v879, %v898
    %vm904 = vc.u32 %v879, %v898
    %v905 = vadd.s32 %v901, 1
    %v906 = vsel %vm904, %v905, %v901
    %v907 = vadd.s32 %v902, %v906
    %v908 = vadd.s32 %v907, 536870912
    %v909 = vshrl.u32 %v908, 30
    %v910 = vshll.u32 %v909, 30
    %v911 = vsub.s32 %v907, %v910
    %vm912 = vcmp.lt.s32.totalorder %v911, 0
    %v913 = vsub.s32 0, %v911
    %v914 = vsel %vm912, %v913, %v911
    %v915 = vclz %v914
    %v916 = vsub.s32 %v915, 2
    %vm917 = vcmp.gt.s32.totalorder 0, %v916
    %v918 = vsel %vm917, 0, %v916
    %v919 = vsub.s32 32, %v918
    %v920 = vshll.u32 %v911, %v918
    %v921 = vshrl.u32 %v903, %v919
    %v922 = vor.u32 %v920, %v921
    %v923 = vsub.s32 4294967266, %v918
    %v924 = vadd.s32 %v923, 127
    %v925 = vshll.u32 %v924, 23
    %v926 = vor.u32 4788187, %v925
    %v927 = vand.u32 2147483647, %v926
    %v929 = vcvt.s32.f32 %v922
    %v930 = vmul.f32 %v929, %v927
    %v931 = vxor.u32 %v930, 2147483648
    %v932 = vsel %vm811, %v931, %v930
    %v933 = vsub.s32 4, %v909
    %v934 = vsel %vm811, %v933, %v909
    %v935 = vsel %vm810, %v153, %v932
    %v936 = vsel %vm810, 0, %v934
    %v937 = vmul.f32 %v935, %v935
    %v938 = vmul.f32 %v937, -0.001358992
    %v939 = vadd.f32 %v938, 0.041655596
    %v940 = vmul.f32 %v937, %v939
    %v941 = vadd.f32 %v940, -0.4999988
    %v942 = vmul.f32 %v937, %v941
    %v943 = vadd.f32 1.0, %v942
    %v944 = vmul.f32 %v935, %v935
    %v945 = vmul.f32 %v944, -0.00019511016
    %v946 = vadd.f32 %v945, 0.008332121
    %v947 = vmul.f32 %v944, %v946
    %v948 = vadd.f32 %v947, -0.16666654
    %v949 = vmul.f32 %v944, %v948
    %v950 = vadd.f32 %v949, 1.0
    %v951 = vmul.f32 %v950, %v935
    %vm952 = vweird.f32 %v153
    %v953 = vadd.s32 %v936, 3
    %v954 = vand.u32 %v953, 3
    %vm955 = vcmp.lt.s32.totalorder %v954, 2
    %vm956 = vcmp.eq.s32.totalorder %v954, 0
    %v957 = vxor.u32 %v951, 2147483648
    %v958 = vsel %vm956, %v943, %v957
    %vm959 = vcmp.eq.s32.totalorder %v954, 2
    %v960 = vxor.u32 %v943, 2147483648
    %v961 = vsel %vm959, %v960, %v951
    %v962 = vsel %vm955, %v958, %v961
    %v963 = vsel %vm952, nan, %v962
    %v964 = vand.u32 2147483647, %v176
    %vm965 = vcmp.le.f32.partialorder %v964, 0.7853982
    %vm966 = vcmp.lt.s32.totalorder %v176, 0
    %v967 = vand.u32 %v176, 2139095040
    %v968 = vshrl.u32 %v967, 23
    %v969 = vsub.s32 %v968, 127
    %v970 = vand.u32 2147483647, %v176
    %v971 = vand.u32 %v970, 8388607
    %v972 = vor.u32 %v971, 8388608
    %v973 = vsub.s32 0, %v972
    %v974 = vadd.s32 %v969, 1
    %vm975 = vcmp.gt.s32.totalorder %v974, 0
    %v976 = vsel %vm975, %v974, 0
    %v977 = vshrl.u32 %v976, 5
    %v978 = vand.u32 %v976, 31
    %v979 = vsub.s32 32, %v978
    %v980 = vshrl.u32 683565275, %v979
    %v981 = vshll.u32 683565275, %v978
    %v982 = vshrl.u32 2475754826, %v979
    %v983 = vor.u32 %v981, %v982
    %v984 = vshll.u32 2475754826, %v978
    %v985 = vshrl.u32 2131351028, %v979
    %v986 = vor.u32 %v984, %v985
    %v987 = vshll.u32 2131351028, %v978
    %v988 = vshrl.u32 2102212464, %v979
    %v989 = vor.u32 %v987, %v988
    %v990 = vshll.u32 2102212464, %v978
    %v991 = vshrl.u32 920167782, %v979
    %v992 = vor.u32 %v990, %v991
    %v993 = vshll.u32 920167782, %v978
    %v994 = vshrl.u32 1326507024, %v979
    %v995 = vor.u32 %v993, %v994
    %vm996 = vcmp.lt.s32.totalorder %v977, 1
    %vm997 = vcmp.lt.s32.totalorder %v977, 2
    %vm998 = vcmp.lt.s32.totalorder %v977, 3
    %vm999 = vcmp.lt.s32.totalorder %v977, 4
    %v1000 = vsel %vm996, %v980, %v983
    %v1001 = vsel %vm999, %v989, 2102212464
    %v1002 = vsel %vm998, %v986, %v1001
    %v1003 = vsel %vm997, %v1000, %v1002
    %v1004 = vsel %vm996, %v983, %v986
    %v1005 = vsel %vm999, %v992, 920167782
    %v1006 = vsel %vm998, %v989, %v1005
    %v1007 = vsel %vm997, %v1004, %v1006
    %v1008 = vsel %vm996, %v986, %v989
    %v1009 = vsel %vm999, %v995, 1326507024
    %v1010 = vsel %vm998, %v992, %v1009
    %v1011 = vsel %vm997, %v1008, %v1010
    %v1012 = vshll.u32 %v972, 8
    %v1013 = vand.u32 %v1012, 65535
    %v1014 = vshrl.u32 %v1012, 16
    %v1015 = vand.u32 %v1011, 65535
    %v1016 = vshrl.u32 %v1011, 16
    %v1017 = vmul.u32 %v1013, %v1015
    %v1018 = vmul.u32 %v1013, %v1016
    %v1019 = vmul.u32 %v1014, %v1015
    %v1020 = vmul.u32 %v1014, %v1016
    %v1021 = vshll.u32 %v1018, 16
    %v1022 = vshrl.u32 %v1018, 16
    %v1023 = vshll.u32 %v1019, 16
    %v1024 = vshrl.u32 %v1019, 16
    %vm1025 = vc.u32 %v1017, %v1021
    %v1026 = vsel %vm1025, 1, 0
    %v1027 = vadd.s32 %v1017, %v1021
    %v1028 = vadd.s32 %v1020, %v1026
    %vm1029 = vc.u32 %v1027, %v1023
    %v1030 = vsel %vm1029, 1, 0
    %v1031 = vadd.s32 %v1027, %v1023
    %v1032 = vadd.s32 %v1028, %v1030
    %v1033 = vadd.s32 %v1032, %v1022
    %v1034 = vadd.s32 %v1033, %v1024
    %v1035 = vand.u32 %v1012, 65535
    %v1036 = vshrl.u32 %v1012, 16
    %v1037 = vand.u32 %v1007, 65535
    %v1038 = vshrl.u32 %v1007, 16
    %v1039 = vmul.u32 %v1035, %v1037
    %v1040 = vmul.u32 %v1035, %v1038
    %v1041 = vmul.u32 %v1036, %v1037
    %v1042 = vmul.u32 %v1036, %v1038
    %v1043 = vshll.u32 %v1040, 16
    %v1044 = vshrl.u32 %v1040, 16
    %v1045 = vshll.u32 %v1041, 16
    %v1046 = vshrl.u32 %v1041, 16
    %vm1047 = vc.u32 %v1039, %v1043
    %v1048 = vsel %vm1047, 1, 0
    %v1049 = vadd.s32 %v1039, %v1043
    %v1050 = vadd.s32 %v1042, %v1048
    %vm1051 = vc.u32 %v1049, %v1045
    %v1052 = vsel %vm1051, 1, 0
    %v1053 = vadd.s32 %v1049, %v1045
    %v1054 = vadd.s32 %v1050, %v1052
    %v1055 = vadd.s32 %v1054, %v1044
    %v1056 = vadd.s32 %v1055, %v1046
    %v1057 = vmul.u32 %v1012, %v1003
    %v1058 = vadd.s32 %v1034, %v1053
    %vm1059 = vc.u32 %v1034, %v1053
    %v1060 = vadd.s32 %v1056, 1
    %v1061 = vsel %vm1059, %v1060, %v1056
    %v1062 = vadd.s32 %v1057, %v1061
    %v1063 = vadd.s32 %v1062, 536870912
    %v1064 = vshrl.u32 %v1063, 30
    %v1065 = vshll.u32 %v1064, 30
    %v1066 = vsub.s32 %v1062, %v1065
    %vm1067 = vcmp.lt.s32.totalorder %v1066, 0
    %v1068 = vsub.s32 0, %v1066
    %v1069 = vsel %vm1067, %v1068, %v1066
    %v1070 = vclz %v1069
    %v1071 = vsub.s32 %v1070, 2
    %vm1072 = vcmp.gt.s32.totalorder 0, %v1071
    %v1073 = vsel %vm1072, 0, %v1071
    %v1074 = vsub.s32 32, %v1073
    %v1075 = vshll.u32 %v1066, %v1073
    %v1076 = vshrl.u32 %v1058, %v1074
    %v1077 = vor.u32 %v1075, %v1076
    %v1078 = vsub.s32 4294967266, %v1073
    %v1079 = vadd.s32 %v1078, 127
    %v1080 = vshll.u32 %v1079, 23
    %v1081 = vor.u32 4788187, %v1080
    %v1082 = vand.u32 2147483647, %v1081
    %v1084 = vcvt.s32.f32 %v1077
    %v1085 = vmul.f32 %v1084, %v1082
    %v1086 = vxor.u32 %v1085, 2147483648
    %v1087 = vsel %vm966, %v1086, %v1085
    %v1088 = vsub.s32 4, %v1064
    %v1089 = vsel %vm966, %v1088, %v1064
    %v1090 = vsel %vm965, %v176, %v1087
    %v1091 = vsel %vm965, 0, %v1089
    %v1092 = vmul.f32 %v1090, %v1090
    %v1093 = vmul.f32 %v1092, -0.001358992
    %v1094 = vadd.f32 %v1093, 0.041655596
    %v1095 = vmul.f32 %v1092, %v1094
    %v1096 = vadd.f32 %v1095, -0.4999988
    %v1097 = vmul.f32 %v1092, %v1096
    %v1098 = vadd.f32 1.0, %v1097
    %v1099 = vmul.f32 %v1090, %v1090
    %v1100 = vmul.f32 %v1099, -0.00019511016
    %v1101 = vadd.f32 %v1100, 0.008332121
    %v1102 = vmul.f32 %v1099, %v1101
    %v1103 = vadd.f32 %v1102, -0.16666654
    %v1104 = vmul.f32 %v1099, %v1103
    %v1105 = vadd.f32 %v1104, 1.0
    %v1106 = vmul.f32 %v1105, %v1090
    %vm1107 = vweird.f32 %v176
    %v1108 = vadd.s32 %v1091, 3
    %v1109 = vand.u32 %v1108, 3
    %vm1110 = vcmp.lt.s32.totalorder %v1109, 2
    %vm1111 = vcmp.eq.s32.totalorder %v1109, 0
    %v1112 = vxor.u32 %v1106, 2147483648
    %v1113 = vsel %vm1111, %v1098, %v1112
    %vm1114 = vcmp.eq.s32.totalorder %v1109, 2
    %v1115 = vxor.u32 %v1098, 2147483648
    %v1116 = vsel %vm1114, %v1115, %v1106
    %v1117 = vsel %vm1110, %v1113, %v1116
    %v1118 = vsel %vm1107, nan, %v1117
    %v1119 = vand.u32 2147483647, %v156
    %vm1120 = vcmp.le.f32.partialorder %v1119, 0.7853982
    %vm1121 = vcmp.lt.s32.totalorder %v156, 0
    %v1122 = vand.u32 %v156, 2139095040
    %v1123 = vshrl.u32 %v1122, 23
    %v1124 = vsub.s32 %v1123, 127
    %v1125 = vand.u32 2147483647, %v156
    %v1126 = vand.u32 %v1125, 8388607
    %v1127 = vor.u32 %v1126, 8388608
    %v1128 = vsub.s32 0, %v1127
    %v1129 = vadd.s32 %v1124, 1
    %vm1130 = vcmp.gt.s32.totalorder %v1129, 0
    %v1131 = vsel %vm1130, %v1129, 0
    %v1132 = vshrl.u32 %v1131, 5
    %v1133 = vand.u32 %v1131, 31
    %v1134 = vsub.s32 32, %v1133
    %v1135 = vshrl.u32 683565275, %v1134
    %v1136 = vshll.u32 683565275, %v1133
    %v1137 = vshrl.u32 2475754826, %v1134
    %v1138 = vor.u32 %v1136, %v1137
    %v1139 = vshll.u32 2475754826, %v1133
    %v1140 = vshrl.u32 2131351028, %v1134
    %v1141 = vor.u32 %v1139, %v1140
    %v1142 = vshll.u32 2131351028, %v1133
    %v1143 = vshrl.u32 2102212464, %v1134
    %v1144 = vor.u32 %v1142, %v1143
    %v1145 = vshll.u32 2102212464, %v1133
    %v1146 = vshrl.u32 920167782, %v1134
    %v1147 = vor.u32 %v1145, %v1146
    %v1148 = vshll.u32 920167782, %v1133
    %v1149 = vshrl.u32 1326507024, %v1134
    %v1150 = vor.u32 %v1148, %v1149
    %vm1151 = vcmp.lt.s32.totalorder %v1132, 1
    %vm1152 = vcmp.lt.s32.totalorder %v1132, 2
    %vm1153 = vcmp.lt.s32.totalorder %v1132, 3
    %vm1154 = vcmp.lt.s32.totalorder %v1132, 4
    %v1155 = vsel %vm1151, %v1135, %v1138
    %v1156 = vsel %vm1154, %v1144, 2102212464
    %v1157 = vsel %vm1153, %v1141, %v1156
    %v1158 = vsel %vm1152, %v1155, %v1157
    %v1159 = vsel %vm1151, %v1138, %v1141
    %v1160 = vsel %vm1154, %v1147, 920167782
    %v1161 = vsel %vm1153, %v1144, %v1160
    %v1162 = vsel %vm1152, %v1159, %v1161
    %v1163 = vsel %vm1151, %v1141, %v1144
    %v1164 = vsel %vm1154, %v1150, 1326507024
    %v1165 = vsel %vm1153, %v1147, %v1164
    %v1166 = vsel %vm1152, %v1163, %v1165
    %v1167 = vshll.u32 %v1127, 8
    %v1168 = vand.u32 %v1167, 65535
    %v1169 = vshrl.u32 %v1167, 16
    %v1170 = vand.u32 %v1166, 65535
    %v1171 = vshrl.u32 %v1166, 16
    %v1172 = vmul.u32 %v1168, %v1170
    %v1173 = vmul.u32 %v1168, %v1171
    %v1174 = vmul.u32 %v1169, %v1170
    %v1175 = vmul.u32 %v1169, %v1171
    %v1176 = vshll.u32 %v1173, 16
    %v1177 = vshrl.u32 %v1173, 16
    %v1178 = vshll.u32 %v1174, 16
    %v1179 = vshrl.u32 %v1174, 16
    %vm1180 = vc.u32 %v1172, %v1176
    %v1181 = vsel %vm1180, 1, 0
    %v1182 = vadd.s32 %v1172, %v1176
    %v1183 = vadd.s32 %v1175, %v1181
    %vm1184 = vc.u32 %v1182, %v1178
    %v1185 = vsel %vm1184, 1, 0
    %v1186 = vadd.s32 %v1182, %v1178
    %v1187 = vadd.s32 %v1183, %v1185
    %v1188 = vadd.s32 %v1187, %v1177
    %v1189 = vadd.s32 %v1188, %v1179
    %v1190 = vand.u32 %v1167, 65535
    %v1191 = vshrl.u32 %v1167, 16
    %v1192 = vand.u32 %v1162, 65535
    %v1193 = vshrl.u32 %v1162, 16
    %v1194 = vmul.u32 %v1190, %v1192
    %v1195 = vmul.u32 %v1190, %v1193
    %v1196 = vmul.u32 %v1191, %v1192
    %v1197 = vmul.u32 %v1191, %v1193
    %v1198 = vshll.u32 %v1195, 16
    %v1199 = vshrl.u32 %v1195, 16
    %v1200 = vshll.u32 %v1196, 16
    %v1201 = vshrl.u32 %v1196, 16
    %vm1202 = vc.u32 %v1194, %v1198
    %v1203 = vsel %vm1202, 1, 0
    %v1204 = vadd.s32 %v1194, %v1198
    %v1205 = vadd.s32 %v1197, %v1203
    %vm1206 = vc.u32 %v1204, %v1200
    %v1207 = vsel %vm1206, 1, 0
    %v1208 = vadd.s32 %v1204, %v1200
    %v1209 = vadd.s32 %v1205, %v1207
    %v1210 = vadd.s32 %v1209, %v1199
    %v1211 = vadd.s32 %v1210, %v1201
    %v1212 = vmul.u32 %v1167, %v1158
    %v1213 = vadd.s32 %v1189, %v1208
    %vm1214 = vc.u32 %v1189, %v1208
    %v1215 = vadd.s32 %v1211, 1
    %v1216 = vsel %vm1214, %v1215, %v1211
    %v1217 = vadd.s32 %v1212, %v1216
    %v1218 = vadd.s32 %v1217, 536870912
    %v1219 = vshrl.u32 %v1218, 30
    %v1220 = vshll.u32 %v1219, 30
    %v1221 = vsub.s32 %v1217, %v1220
    %vm1222 = vcmp.lt.s32.totalorder %v1221, 0
    %v1223 = vsub.s32 0, %v1221
    %v1224 = vsel %vm1222, %v1223, %v1221
    %v1225 = vclz %v1224
    %v1226 = vsub.s32 %v1225, 2
    %vm1227 = vcmp.gt.s32.totalorder 0, %v1226
    %v1228 = vsel %vm1227, 0, %v1226
    %v1229 = vsub.s32 32, %v1228
    %v1230 = vshll.u32 %v1221, %v1228
    %v1231 = vshrl.u32 %v1213, %v1229
    %v1232 = vor.u32 %v1230, %v1231
    %v1233 = vsub.s32 4294967266, %v1228
    %v1234 = vadd.s32 %v1233, 127
    %v1235 = vshll.u32 %v1234, 23
    %v1236 = vor.u32 4788187, %v1235
    %v1237 = vand.u32 2147483647, %v1236
    %v1239 = vcvt.s32.f32 %v1232
    %v1240 = vmul.f32 %v1239, %v1237
    %v1241 = vxor.u32 %v1240, 2147483648
    %v1242 = vsel %vm1121, %v1241, %v1240
    %v1243 = vsub.s32 4, %v1219
    %v1244 = vsel %vm1121, %v1243, %v1219
    %v1245 = vsel %vm1120, %v156, %v1242
    %v1246 = vsel %vm1120, 0, %v1244
    %v1247 = vmul.f32 %v1245, %v1245
    %v1248 = vmul.f32 %v1247, -0.001358992
    %v1249 = vadd.f32 %v1248, 0.041655596
    %v1250 = vmul.f32 %v1247, %v1249
    %v1251 = vadd.f32 %v1250, -0.4999988
    %v1252 = vmul.f32 %v1247, %v1251
    %v1253 = vadd.f32 1.0, %v1252
    %v1254 = vmul.f32 %v1245, %v1245
    %v1255 = vmul.f32 %v1254, -0.00019511016
    %v1256 = vadd.f32 %v1255, 0.008332121
    %v1257 = vmul.f32 %v1254, %v1256
    %v1258 = vadd.f32 %v1257, -0.16666654
    %v1259 = vmul.f32 %v1254, %v1258
    %v1260 = vadd.f32 %v1259, 1.0
    %v1261 = vmul.f32 %v1260, %v1245
    %vm1262 = vweird.f32 %v156
    %v1263 = vadd.s32 %v1246, 3
    %v1264 = vand.u32 %v1263, 3
    %vm1265 = vcmp.lt.s32.totalorder %v1264, 2
    %vm1266 = vcmp.eq.s32.totalorder %v1264, 0
    %v1267 = vxor.u32 %v1261, 2147483648
    %v1268 = vsel %vm1266, %v1253, %v1267
    %vm1269 = vcmp.eq.s32.totalorder %v1264, 2
    %v1270 = vxor.u32 %v1253, 2147483648
    %v1271 = vsel %vm1269, %v1270, %v1261
    %v1272 = vsel %vm1265, %v1268, %v1271
    %v1273 = vsel %vm1262, nan, %v1272
    %v1274 = vand.u32 2147483647, %v179
    %vm1275 = vcmp.le.f32.partialorder %v1274, 0.7853982
    %vm1276 = vcmp.lt.s32.totalorder %v179, 0
    %v1277 = vand.u32 %v179, 2139095040
    %v1278 = vshrl.u32 %v1277, 23
    %v1279 = vsub.s32 %v1278, 127
    %v1280 = vand.u32 2147483647, %v179
    %v1281 = vand.u32 %v1280, 8388607
    %v1282 = vor.u32 %v1281, 8388608
    %v1283 = vsub.s32 0, %v1282
    %v1284 = vadd.s32 %v1279, 1
    %vm1285 = vcmp.gt.s32.totalorder %v1284, 0
    %v1286 = vsel %vm1285, %v1284, 0
    %v1287 = vshrl.u32 %v1286, 5
    %v1288 = vand.u32 %v1286, 31
    %v1289 = vsub.s32 32, %v1288
    %v1290 = vshrl.u32 683565275, %v1289
    %v1291 = vshll.u32 683565275, %v1288
    %v1292 = vshrl.u32 2475754826, %v1289
    %v1293 = vor.u32 %v1291, %v1292
    %v1294 = vshll.u32 2475754826, %v1288
    %v1295 = vshrl.u32 2131351028, %v1289
    %v1296 = vor.u32 %v1294, %v1295
    %v1297 = vshll.u32 2131351028, %v1288
    %v1298 = vshrl.u32 2102212464, %v1289
    %v1299 = vor.u32 %v1297, %v1298
    %v1300 = vshll.u32 2102212464, %v1288
    %v1301 = vshrl.u32 920167782, %v1289
    %v1302 = vor.u32 %v1300, %v1301
    %v1303 = vshll.u32 920167782, %v1288
    %v1304 = vshrl.u32 1326507024, %v1289
    %v1305 = vor.u32 %v1303, %v1304
    %vm1306 = vcmp.lt.s32.totalorder %v1287, 1
    %vm1307 = vcmp.lt.s32.totalorder %v1287, 2
    %vm1308 = vcmp.lt.s32.totalorder %v1287, 3
    %vm1309 = vcmp.lt.s32.totalorder %v1287, 4
    %v1310 = vsel %vm1306, %v1290, %v1293
    %v1311 = vsel %vm1309, %v1299, 2102212464
    %v1312 = vsel %vm1308, %v1296, %v1311
    %v1313 = vsel %vm1307, %v1310, %v1312
    %v1314 = vsel %vm1306, %v1293, %v1296
    %v1315 = vsel %vm1309, %v1302, 920167782
    %v1316 = vsel %vm1308, %v1299, %v1315
    %v1317 = vsel %vm1307, %v1314, %v1316
    %v1318 = vsel %vm1306, %v1296, %v1299
    %v1319 = vsel %vm1309, %v1305, 1326507024
    %v1320 = vsel %vm1308, %v1302, %v1319
    %v1321 = vsel %vm1307, %v1318, %v1320
    %v1322 = vshll.u32 %v1282, 8
    %v1323 = vand.u32 %v1322, 65535
    %v1324 = vshrl.u32 %v1322, 16
    %v1325 = vand.u32 %v1321, 65535
    %v1326 = vshrl.u32 %v1321, 16
    %v1327 = vmul.u32 %v1323, %v1325
    %v1328 = vmul.u32 %v1323, %v1326
    %v1329 = vmul.u32 %v1324, %v1325
    %v1330 = vmul.u32 %v1324, %v1326
    %v1331 = vshll.u32 %v1328, 16
    %v1332 = vshrl.u32 %v1328, 16
    %v1333 = vshll.u32 %v1329, 16
    %v1334 = vshrl.u32 %v1329, 16
    %vm1335 = vc.u32 %v1327, %v1331
    %v1336 = vsel %vm1335, 1, 0
    %v1337 = vadd.s32 %v1327, %v1331
    %v1338 = vadd.s32 %v1330, %v1336
    %vm1339 = vc.u32 %v1337, %v1333
    %v1340 = vsel %vm1339, 1, 0
    %v1341 = vadd.s32 %v1337, %v1333
    %v1342 = vadd.s32 %v1338, %v1340
    %v1343 = vadd.s32 %v1342, %v1332
    %v1344 = vadd.s32 %v1343, %v1334
    %v1345 = vand.u32 %v1322, 65535
    %v1346 = vshrl.u32 %v1322, 16
    %v1347 = vand.u32 %v1317, 65535
    %v1348 = vshrl.u32 %v1317, 16
    %v1349 = vmul.u32 %v1345, %v1347
    %v1350 = vmul.u32 %v1345, %v1348
    %v1351 = vmul.u32 %v1346, %v1347
    %v1352 = vmul.u32 %v1346, %v1348
    %v1353 = vshll.u32 %v1350, 16
    %v1354 = vshrl.u32 %v1350, 16
    %v1355 = vshll.u32 %v1351, 16
    %v1356 = vshrl.u32 %v1351, 16
    %vm1357 = vc.u32 %v1349, %v1353
    %v1358 = vsel %vm1357, 1, 0
    %v1359 = vadd.s32 %v1349, %v1353
    %v1360 = vadd.s32 %v1352, %v1358
    %vm1361 = vc.u32 %v1359, %v1355
    %v1362 = vsel %vm1361, 1, 0
    %v1363 = vadd.s32 %v1359, %v1355
    %v1364 = vadd.s32 %v1360, %v1362
    %v1365 = vadd.s32 %v1364, %v1354
    %v1366 = vadd.s32 %v1365, %v1356
    %v1367 = vmul.u32 %v1322, %v1313
    %v1368 = vadd.s32 %v1344, %v1363
    %vm1369 = vc.u32 %v1344, %v1363
    %v1370 = vadd.s32 %v1366, 1
    %v1371 = vsel %vm1369, %v1370, %v1366
    %v1372 = vadd.s32 %v1367, %v1371
    %v1373 = vadd.s32 %v1372, 536870912
    %v1374 = vshrl.u32 %v1373, 30
    %v1375 = vshll.u32 %v1374, 30
    %v1376 = vsub.s32 %v1372, %v1375
    %vm1377 = vcmp.lt.s32.totalorder %v1376, 0
    %v1378 = vsub.s32 0, %v1376
    %v1379 = vsel %vm1377, %v1378, %v1376
    %v1380 = vclz %v1379
    %v1381 = vsub.s32 %v1380, 2
    %vm1382 = vcmp.gt.s32.totalorder 0, %v1381
    %v1383 = vsel %vm1382, 0, %v1381
    %v1384 = vsub.s32 32, %v1383
    %v1385 = vshll.u32 %v1376, %v1383
    %v1386 = vshrl.u32 %v1368, %v1384
    %v1387 = vor.u32 %v1385, %v1386
    %v1388 = vsub.s32 4294967266, %v1383
    %v1389 = vadd.s32 %v1388, 127
    %v1390 = vshll.u32 %v1389, 23
    %v1391 = vor.u32 4788187, %v1390
    %v1392 = vand.u32 2147483647, %v1391
    %v1394 = vcvt.s32.f32 %v1387
    %v1395 = vmul.f32 %v1394, %v1392
    %v1396 = vxor.u32 %v1395, 2147483648
    %v1397 = vsel %vm1276, %v1396, %v1395
    %v1398 = vsub.s32 4, %v1374
    %v1399 = vsel %vm1276, %v1398, %v1374
    %v1400 = vsel %vm1275, %v179, %v1397
    %v1401 = vsel %vm1275, 0, %v1399
    %v1402 = vmul.f32 %v1400, %v1400
    %v1403 = vmul.f32 %v1402, -0.001358992
    %v1404 = vadd.f32 %v1403, 0.041655596
    %v1405 = vmul.f32 %v1402, %v1404
    %v1406 = vadd.f32 %v1405, -0.4999988
    %v1407 = vmul.f32 %v1402, %v1406
    %v1408 = vadd.f32 1.0, %v1407
    %v1409 = vmul.f32 %v1400, %v1400
    %v1410 = vmul.f32 %v1409, -0.00019511016
    %v1411 = vadd.f32 %v1410, 0.008332121
    %v1412 = vmul.f32 %v1409, %v1411
    %v1413 = vadd.f32 %v1412, -0.16666654
    %v1414 = vmul.f32 %v1409, %v1413
    %v1415 = vadd.f32 %v1414, 1.0
    %v1416 = vmul.f32 %v1415, %v1400
    %vm1417 = vweird.f32 %v179
    %v1418 = vadd.s32 %v1401, 3
    %v1419 = vand.u32 %v1418, 3
    %vm1420 = vcmp.lt.s32.totalorder %v1419, 2
    %vm1421 = vcmp.eq.s32.totalorder %v1419, 0
    %v1422 = vxor.u32 %v1416, 2147483648
    %v1423 = vsel %vm1421, %v1408, %v1422
    %vm1424 = vcmp.eq.s32.totalorder %v1419, 2
    %v1425 = vxor.u32 %v1408, 2147483648
    %v1426 = vsel %vm1424, %v1425, %v1416
    %v1427 = vsel %vm1420, %v1423, %v1426
    %v1428 = vsel %vm1417, nan, %v1427
    %1429 = vst [vmem:[#allocation11] sm:$0xff] %v186
    %1430 = vst [vmem:[#allocation11 + $0x8] sm:$0xff] %v188
    %1431 = vst [vmem:[#allocation11 + $0x10] sm:$0xff] %v190
    %1432 = vst [vmem:[#allocation11 + $0x18] sm:$0xff] %v192
    %v1433 = vmul.f32 %v186, %v346
    %v1434 = vmul.f32 %v188, %v500
    %v1435 = vmul.f32 %v190, %v654
    %v1436 = vmul.f32 %v192, %v808
    %v1437 = vsub.f32 0.0, %v186
    %v1438 = vsub.f32 0.0, %v188
    %v1439 = vsub.f32 0.0, %v190
    %v1440 = vsub.f32 0.0, %v192
    %v1441 = vmul.f32 %v1437, %v963
    %v1442 = vmul.f32 %v1438, %v1118
    %v1443 = vmul.f32 %v1439, %v1273
    %v1444 = vmul.f32 %v1440, %v1428
    %v1445 = vld [vmem:[#allocation2] sm:$0xff]
    %v1446 = vld [vmem:[#allocation2 + $0x8] sm:$0xff]
    %v1447 = vld [vmem:[#allocation2 + $0x10] sm:$0xff]
    %v1448 = vld [vmem:[#allocation2 + $0x18] sm:$0xff]
    %v1449 = vmul.f32 %v1445, %v1433
    %v1450 = vmul.f32 %v1446, %v1434
    %v1451 = vmul.f32 %v1447, %v1435
    %v1452 = vmul.f32 %v1448, %v1436
    %v1453 = vmul.f32 %v1445, %v1441
    %v1454 = vmul.f32 %v1446, %v1442
    %v1455 = vmul.f32 %v1447, %v1443
    %v1456 = vmul.f32 %v1448, %v1444
    %v1457 = vld [vmem:[%s5] sm:$0x3]
    %v1458 = vld [vmem:[%s6] sm:$0x3]
    %v1461 = vrot.slane %v1434, 7
    %vm1462 = vcmask 1040384
    %v1463 = vsel %vm1462, %v1433, %v1461
    %v1465 = vmul.f32 %v1457, %v1463
    %v1468 = vrot.slane %v1442, 7
    %v1469 = vsel %vm1462, %v1441, %v1468
    %v1471 = vmul.f32 %v1458, %v1469
    %v1472 = vsub.f32 %v1465, %v1471
    %v1474 = vperm.slane %v1472, 0
    %v1475 = vperm.slane %v1472, 1
    %vm1478 = vcmask 130048
    %v1480 = vsel %vm1478, %v76, 0
    %v1483 = vsel %vm1478, %v77, 0
    %1485 = vmatpush.msra.mxu0 0.0
    %1486 = vmatpush.msra.mxu0 0.0
    %1487 = vmatpush.msra.mxu0 0.0
    %1488 = vmatpush.msra.mxu0 0.0
    %1489 = vmatpush.msra.mxu0 0.0
    %1490 = vmatpush.msra.mxu0 0.0
    %1491 = vmatpush.msra.mxu0 0.0
    %1492 = vmatpush.msra.mxu0 0.0
    %1493 = vmatpush.msra.mxu0 0.0
    %1494 = vmatpush.msra.mxu0 0.0
    %1495 = vmatpush.msra.mxu0 0.0
    %1496 = vmatpush.msra.mxu0 0.0
    %1497 = vmatpush.msra.mxu0 0.0
    %1498 = vmatpush.msra.mxu0 0.0
    %1499 = vmatpush.msra.mxu0 %v1451
    %1500 = vmatpush.msra.mxu0 %v1449
    %1501 = vmatmul.f32.gmra.mxu0 %v1480
    %v1502 = vpop.f32.mrf.mxu0
    %v1503 = vadd.f32 %v1474, %v1502
    %1504 = vmatmul.f32.gmra.mxu0 %v1483
    %v1505 = vpop.f32.mrf.mxu0
    %v1506 = vadd.f32 %v1474, %v1505
    %1507 = vdwg.mxu0
    %1508 = vmatpush.msra.mxu0 0.0
    %1509 = vmatpush.msra.mxu0 0.0
    %1510 = vmatpush.msra.mxu0 0.0
    %1511 = vmatpush.msra.mxu0 0.0
    %1512 = vmatpush.msra.mxu0 0.0
    %1513 = vmatpush.msra.mxu0 0.0
    %1514 = vmatpush.msra.mxu0 0.0
    %1515 = vmatpush.msra.mxu0 0.0
    %1516 = vmatpush.msra.mxu0 0.0
    %1517 = vmatpush.msra.mxu0 0.0
    %1518 = vmatpush.msra.mxu0 0.0
    %1519 = vmatpush.msra.mxu0 0.0
    %1520 = vmatpush.msra.mxu0 0.0
    %1521 = vmatpush.msra.mxu0 0.0
    %1522 = vmatpush.msra.mxu0 %v1452
    %1523 = vmatpush.msra.mxu0 %v1450
    %1524 = vmatmul.f32.gmra.mxu0 %v1480
    %v1525 = vpop.f32.mrf.mxu0
    %v1526 = vadd.f32 %v1475, %v1525
    %1527 = vmatmul.f32.gmra.mxu0 %v1483
    %v1528 = vpop.f32.mrf.mxu0
    %v1529 = vadd.f32 %v1475, %v1528
    %1530 = vdwg.mxu0
    %v1531 = vmul.f32 %v1457, %v1469
    %v1532 = vmul.f32 %v1458, %v1463
    %v1533 = vadd.f32 %v1531, %v1532
    %v1535 = vperm.slane %v1533, 0
    %v1536 = vperm.slane %v1533, 1
    %1539 = vmatpush.msra.mxu0 0.0
    %1540 = vmatpush.msra.mxu0 0.0
    %1541 = vmatpush.msra.mxu0 0.0
    %1542 = vmatpush.msra.mxu0 0.0
    %1543 = vmatpush.msra.mxu0 0.0
    %1544 = vmatpush.msra.mxu0 0.0
    %1545 = vmatpush.msra.mxu0 0.0
    %1546 = vmatpush.msra.mxu0 0.0
    %1547 = vmatpush.msra.mxu0 0.0
    %1548 = vmatpush.msra.mxu0 0.0
    %1549 = vmatpush.msra.mxu0 0.0
    %1550 = vmatpush.msra.mxu0 0.0
    %1551 = vmatpush.msra.mxu0 0.0
    %1552 = vmatpush.msra.mxu0 0.0
    %1553 = vmatpush.msra.mxu0 %v1455
    %1554 = vmatpush.msra.mxu0 %v1453
    %1555 = vmatmul.f32.gmra.mxu0 %v1480
    %v1556 = vpop.f32.mrf.mxu0
    %v1557 = vadd.f32 %v1535, %v1556
    %1558 = vmatmul.f32.gmra.mxu0 %v1483
    %v1559 = vpop.f32.mrf.mxu0
    %v1560 = vadd.f32 %v1535, %v1559
    %1561 = vdwg.mxu0
    %1562 = vmatpush.msra.mxu0 0.0
    %1563 = vmatpush.msra.mxu0 0.0
    %1564 = vmatpush.msra.mxu0 0.0
    %1565 = vmatpush.msra.mxu0 0.0
    %1566 = vmatpush.msra.mxu0 0.0
    %1567 = vmatpush.msra.mxu0 0.0
    %1568 = vmatpush.msra.mxu0 0.0
    %1569 = vmatpush.msra.mxu0 0.0
    %1570 = vmatpush.msra.mxu0 0.0
    %1571 = vmatpush.msra.mxu0 0.0
    %1572 = vmatpush.msra.mxu0 0.0
    %1573 = vmatpush.msra.mxu0 0.0
    %1574 = vmatpush.msra.mxu0 0.0
    %1575 = vmatpush.msra.mxu0 0.0
    %1576 = vmatpush.msra.mxu0 %v1456
    %1577 = vmatpush.msra.mxu0 %v1454
    %1578 = vmatmul.f32.gmra.mxu0 %v1480
    %v1579 = vpop.f32.mrf.mxu0
    %v1580 = vadd.f32 %v1536, %v1579
    %1581 = vmatmul.f32.gmra.mxu0 %v1483
    %v1582 = vpop.f32.mrf.mxu0
    %v1583 = vadd.f32 %v1536, %v1582
    %1584 = vdwg.mxu0
    %v1585 = vrcp.pop %v186
    %v1586 = vrcp.pop %v188
    %v1587 = vrcp.pop %v190
    %v1588 = vrcp.pop %v192
    %v1589 = vmul.f32 %v186, %v1585
    %v1590 = vmul.f32 %v188, %v1586
    %v1591 = vmul.f32 %v190, %v1587
    %v1592 = vmul.f32 %v192, %v1588
    %v1593 = vsub.f32 2.0, %v1589
    %v1594 = vsub.f32 2.0, %v1590
    %v1595 = vsub.f32 2.0, %v1591
    %v1596 = vsub.f32 2.0, %v1592
    %v1597 = vmul.f32 %v1585, %v1593
    %v1598 = vmul.f32 %v1586, %v1594
    %v1599 = vmul.f32 %v1587, %v1595
    %v1600 = vmul.f32 %v1588, %v1596
    %v1601 = vmul.f32 %v1597, %v346
    %v1602 = vmul.f32 %v1598, %v500
    %v1603 = vmul.f32 %v1599, %v654
    %v1604 = vmul.f32 %v1600, %v808
    %v1605 = vmul.f32 %v1597, %v963
    %v1606 = vmul.f32 %v1598, %v1118
    %v1607 = vmul.f32 %v1599, %v1273
    %v1608 = vmul.f32 %v1600, %v1428
    %v1609 = vmul.f32 %v1503, %v1601
    %v1610 = vmul.f32 %v1526, %v1602
    %v1611 = vmul.f32 %v1506, %v1603
    %v1612 = vmul.f32 %v1529, %v1604
    %v1613 = vmul.f32 %v1557, %v1605
    %v1614 = vmul.f32 %v1580, %v1606
    %v1615 = vmul.f32 %v1560, %v1607
    %v1616 = vmul.f32 %v1583, %v1608
    %v1617 = vsub.f32 %v1609, %v1613
    %v1618 = vsub.f32 %v1610, %v1614
    %v1619 = vsub.f32 %v1611, %v1615
    %v1620 = vsub.f32 %v1612, %v1616
    %1621 = vst [vmem:[#allocation8] sm:$0xff] %v1617
    %1622 = vst [vmem:[#allocation8 + $0x8] sm:$0xff] %v1618
    %1623 = vst [vmem:[#allocation8 + $0x10] sm:$0xff] %v1619
    %1624 = vst [vmem:[#allocation8 + $0x18] sm:$0xff] %v1620
    %v1625 = vmul.f32 %v1503, %v1605
    %v1626 = vmul.f32 %v1526, %v1606
    %v1627 = vmul.f32 %v1506, %v1607
    %v1628 = vmul.f32 %v1529, %v1608
    %v1629 = vmul.f32 %v1557, %v1601
    %v1630 = vmul.f32 %v1580, %v1602
    %v1631 = vmul.f32 %v1560, %v1603
    %v1632 = vmul.f32 %v1583, %v1604
    %v1633 = vadd.f32 %v1625, %v1629
    %v1634 = vadd.f32 %v1626, %v1630
    %v1635 = vadd.f32 %v1627, %v1631
    %v1636 = vadd.f32 %v1628, %v1632
    %1637 = vst [vmem:[#allocation9] sm:$0xff] %v1633
    %1638 = vst [vmem:[#allocation9 + $0x8] sm:$0xff] %v1634
    %1639 = vst [vmem:[#allocation9 + $0x10] sm:$0xff] %v1635
    %1640 = vst [vmem:[#allocation9 + $0x18] sm:$0xff] %v1636
    // Predicated region
    $region42: #{tpu_custom_call.1} parent=1 // pred_check
      _
    $region43: #{tpu_custom_call.1} parent=1 // pred_check_branch
      %1642 = sbr.rel (0) target = $region45
    $region44: #{tpu_custom_call.1} parent=1 // pred_region
      %1644 = vsyncadd [#allocation4], 0
      %s1645 = sshll.u32 [#allocation8], 4
      %s1646 = int_to_ptr.vmem [resolvable:$true] %s1645
      %s1647 = sshll.u32 %s7, 4
      %s1648 = int_to_ptr.hbm [resolvable:$true] %s1647
      %1653 = dma.vmem_to_hbm [thread:$0]  %s1646, 512, %s1648, [#allocation4], 256, 256, 16
    $region45: #{tpu_custom_call.1} parent=1 // pred_fallthru
      _
    // Predicated region
    $region46: #{tpu_custom_call.1} parent=1 // pred_check
      _
    $region47: #{tpu_custom_call.1} parent=1 // pred_check_branch
      %1655 = sbr.rel (0) target = $region49
    $region48: #{tpu_custom_call.1} parent=1 // pred_region
      %1657 = vsyncadd [#allocation10], 0
      %s1658 = sshll.u32 [#allocation9], 4
      %s1659 = int_to_ptr.vmem [resolvable:$true] %s1658
      %s1660 = sshll.u32 %s8, 4
      %s1661 = int_to_ptr.hbm [resolvable:$true] %s1660
      %1666 = dma.vmem_to_hbm [thread:$0]  %s1659, 512, %s1661, [#allocation10], 256, 256, 16
    $region49: #{tpu_custom_call.1} parent=1 // pred_fallthru
      _
    // Predicated region
    $region50: #{tpu_custom_call.1} parent=1 // pred_check
      _
    $region51: #{tpu_custom_call.1} parent=1 // pred_check_branch
      %1668 = sbr.rel (0) target = $region53
    $region52: #{tpu_custom_call.1} parent=1 // pred_region
      %1670 = vsyncadd [#allocation10], 0
      %s1671 = sshll.u32 [#allocation11], 4
      %s1672 = int_to_ptr.vmem [resolvable:$true] %s1671
      %s1673 = sshll.u32 %s9, 4
      %s1674 = int_to_ptr.hbm [resolvable:$true] %s1673
      %1679 = dma.vmem_to_hbm [thread:$0]  %s1672, 512, %s1674, [#allocation10], 256, 256, 16
    $region53: #{tpu_custom_call.1} parent=1 // pred_fallthru
      _
    // Predicated region
    $region54: #{tpu_custom_call.1} parent=1 // pred_check
      _
    $region55: #{tpu_custom_call.1} parent=1 // pred_check_branch
      %1681 = sbr.rel (0) target = $region57
    $region56: #{tpu_custom_call.1} parent=1 // pred_region
      %1683 = dma.done [#allocation4], 512
    $region57: #{tpu_custom_call.1} parent=1 // pred_fallthru
      _
    // Predicated region
    $region58: #{tpu_custom_call.1} parent=1 // pred_check
      _
    $region59: #{tpu_custom_call.1} parent=1 // pred_check_branch
      %1685 = sbr.rel (0) target = $region61
    $region60: #{tpu_custom_call.1} parent=1 // pred_region
      %1687 = dma.done [#allocation10], 512
    $region61: #{tpu_custom_call.1} parent=1 // pred_fallthru
      _
    // Predicated region
    $region62: #{tpu_custom_call.1} parent=1 // pred_check
      _
    $region63: #{tpu_custom_call.1} parent=1 // pred_check_branch
      %1689 = sbr.rel (0) target = $region65
    $region64: #{tpu_custom_call.1} parent=1 // pred_region
      %1691 = dma.done [#allocation10], 512
    $region65: #{tpu_custom_call.1} parent=1 // pred_fallthru
      _
    %1692 = vsyncpa [#allocation3], 1
    %1693 = vsyncpa [#allocation6], 1
    %1694 = vsyncpa [#allocation4], 1
    %1695 = vsyncpa [#allocation10], 1

</llo_original>
